<compile_context>
chip_gen: v7x
topology: tpu7x:2x2x1
jax: 0.10.0
libtpu: 0.0.40
codegen_flags: <defaults>
</compile_context>

<pallas_src>
import jax
import jax.numpy as jnp
from jax import lax
from jax.experimental import pallas as pl
from jax.experimental.pallas import tpu as pltpu


def _round_up(x, m):
    return ((x + m - 1) // m) * m


def _log_sigmoid(x):
    # single-transcendental, numerically stable logsigmoid:
    #   logsigmoid(x) = min(x, 0) - log1p(exp(-|x|))
    return jnp.minimum(x, 0.0) - jnp.log1p(jnp.exp(-jnp.abs(x)))


def _make_kernel(true_b, K, V, E, TB, table_dtype):
    KP2 = K + 2  # columns of the fused index tile: [center | target | negatives]

    def kernel(emb_v_ref, emb_u_ref, idx_ref, out_ref):
        blk = pl.program_id(0)

        emb_v = emb_v_ref[...]      # (V, E), VMEM-resident across all grid steps
        emb_u = emb_u_ref[...]      # (V, E), VMEM-resident across all grid steps
        idx = idx_ref[...]          # (TB, K+2) int32

        v_iota = lax.broadcasted_iota(jnp.int32, (TB, V), 1)

        # center = embedding_v[center_words]  -- one-hot gather on the MXU
        c_onehot = (v_iota == idx[:, 0:1]).astype(table_dtype)             # (TB, V)
        center = jnp.dot(c_onehot, emb_v,
                         preferred_element_type=jnp.float32)               # (TB, E)

        # target (j==1) and negatives (j>=2): per-j one-hot gather matmul against
        # emb_u in its native layout, then a small reduce over E against `center`.
        per_row = jnp.zeros((TB, 1), dtype=jnp.float32)
        for j in range(1, KP2):  # small, static -> unrolled at trace time
            onehot = (v_iota == idx[:, j:j + 1]).astype(table_dtype)       # (TB, V)
            u_j = jnp.dot(onehot, emb_u,
                          preferred_element_type=jnp.float32)              # (TB, E)
            s = jnp.sum(u_j * center, axis=-1, keepdims=True)              # (TB, 1)
            s = s if j == 1 else -s                                        # negate negatives
            per_row = per_row + _log_sigmoid(s)

        # mask padded rows (when B is not a multiple of TB)
        row = blk * TB + lax.broadcasted_iota(jnp.int32, (TB, 1), 0)
        per_row = jnp.where(row < true_b, per_row, 0.0)

        # lane-dense partial-sum block: every lane carries this block's sum, so
        # the host-side reduction is jnp.sum(partials) / (B * 8 * 128).
        out_ref[...] = jnp.full((1, 8, 128), jnp.sum(per_row), dtype=jnp.float32)

    return kernel


def skipgram_neg_sampling_loss(emb_v, emb_u, center_words, target_words,
                               negative_words, *, tb_max=512,
                               table_dtype=jnp.float32):
    """emb_v/emb_u: (V, E) float. center/target: (B, 1) int; negatives: (B, K) int."""
    V, E = emb_v.shape
    B = center_words.shape[0]
    K = negative_words.shape[1]

    # --- tile sizing: cap TB by tb_max AND by V so a (TB, V) f32 temp <= ~2 MiB ---
    onehot_budget = 2 * 1024 * 1024
    tb_cap_from_v = max(8, ((onehot_budget // (4 * V)) // 8) * 8)
    TB = min(tb_max, tb_cap_from_v, _round_up(B, 8))
    TB = max(8, (TB // 8) * 8)
    B_pad = _round_up(B, TB)
    G = B_pad // TB

    # fused (B, K+2) int32 index tile: [center | target | negatives]
    idx = jnp.concatenate(
        [center_words.astype(jnp.int32).reshape(B, 1),
         target_words.astype(jnp.int32).reshape(B, 1),
         negative_words.astype(jnp.int32)], axis=1)
    if B_pad != B:
        idx = jnp.pad(idx, ((0, B_pad - B), (0, 0)))

    emb_v = emb_v.astype(table_dtype)
    emb_u = emb_u.astype(table_dtype)
    itemsize = jnp.dtype(table_dtype).itemsize

    # --- per-generation VMEM budget ---------------------------------------------
    table_bytes = 2 * V * E * itemsize                       # both tables, single-buffered
    working_bytes = (4 * TB * V + 6 * TB * E + TB * (K + 2)) * 4
    try:
        vmem_cap = int(pltpu.get_tpu_info().vmem_capacity_bytes)
    except Exception:
        vmem_cap = 64 * 1024 * 1024                           # v7x per-TC worst case
    if table_bytes + working_bytes > int(0.75 * vmem_cap):
        # TODO(synk): implement pl.ANY tables + scalar-prefetched DMA gathers here.
        raise NotImplementedError(
            "embedding tables do not fit the resident-table VMEM budget on this "
            "TPU generation; the DMA-gather fallback is not implemented")
    vmem_limit = min(vmem_cap,
                     max(32 << 20,
                         _round_up(2 * table_bytes + 2 * working_bytes, 1 << 20)
                         + (8 << 20)))

    kernel = _make_kernel(true_b=B, K=K, V=V, E=E, TB=TB, table_dtype=table_dtype)

    cost = pl.CostEstimate(
        flops=B_pad * (2 * (K + 2) * V * E + 2 * (K + 1) * E),
        transcendentals=2 * B_pad * (K + 1),
        bytes_accessed=2 * V * E * itemsize
        + (B_pad * (K + 2) + G * 8 * 128) * 4,
    )

    def build_call(single_buffer_tables):
        table_kwargs = (dict(pipeline_mode=pl.Buffered(1))
                        if single_buffer_tables else {})
        return pl.pallas_call(
            kernel,
            out_shape=jax.ShapeDtypeStruct((G, 8, 128), jnp.float32),
            grid_spec=pltpu.PrefetchScalarGridSpec(
                num_scalar_prefetch=0,
                grid=(G,),
                in_specs=[
                    pl.BlockSpec((V, E), lambda i: (0, 0), **table_kwargs),  # emb_v
                    pl.BlockSpec((V, E), lambda i: (0, 0), **table_kwargs),  # emb_u
                    pl.BlockSpec((TB, K + 2), lambda i: (i, 0)),             # indices
                ],
                out_specs=pl.BlockSpec((1, 8, 128), lambda i: (i, 0, 0)),
            ),
            compiler_params=pltpu.CompilerParams(
                dimension_semantics=("parallel",),
                vmem_limit_bytes=int(vmem_limit),
            ),
            cost_estimate=cost,
        )

    try:
        partials = build_call(single_buffer_tables=True)(emb_v, emb_u, idx)
    except Exception:
        # pl.Buffered(1) not supported by this jax/Mosaic version -> default buffering.
        partials = build_call(single_buffer_tables=False)(emb_v, emb_u, idx)

    # -mean over the TRUE batch size; every lane of every (8,128) block carries
    # its block's sum, hence the extra / (8 * 128).
    return -(jnp.sum(partials) / (B * 8 * 128))


def _reference_loss(emb_v, emb_u, center_words, target_words, negative_words):
    center = emb_v[center_words[:, 0]]                       # (B, E)
    target = emb_u[target_words[:, 0]]                       # (B, E)
    neg = -emb_u[negative_words]                             # (B, K, E)
    pos = jnp.sum(target * center, axis=-1)                  # (B,)
    negs = jnp.sum(neg * center[:, None, :], axis=-1)        # (B, K)
    loss = jax.nn.log_sigmoid(pos) + jnp.sum(jax.nn.log_sigmoid(negs), axis=-1)
    return -jnp.mean(loss)


if __name__ == "__main__":
    key = jax.random.PRNGKey(0)
    vocab_size, emb_size = 50, 32
    B, K = 8, 5

    k1, k2, k3, k4, k5 = jax.random.split(key, 5)
    # deterministic "parameters" (nn.Embedding weights)
    emb_v = jax.random.normal(k1, (vocab_size, emb_size), dtype=jnp.float32)
    emb_u = jax.random.normal(k2, (vocab_size, emb_size), dtype=jnp.float32)

    center_words = jax.random.randint(k3, (B, 1), 0, vocab_size, dtype=jnp.int32)
    target_words = jax.random.randint(k4, (B, 1), 0, vocab_size, dtype=jnp.int32)
    negative_words = jax.random.randint(k5, (B, K), 0, vocab_size, dtype=jnp.int32)

    loss = skipgram_neg_sampling_loss(
        emb_v, emb_u, center_words, target_words, negative_words
    )
    jax.block_until_ready(loss)

    ref = _reference_loss(emb_v, emb_u, center_words, target_words, negative_words)
    assert jnp.allclose(loss, ref, rtol=1e-5, atol=1e-5), (loss, ref)

    print("KERNEL_OK")
</pallas_src>

<mosaic_0001>
module attributes {stable_mosaic.version = 11 : i64} {
  func.func @kernel(%arg0: i32, %arg1: memref<50x32xf32, #tpu.memory_space<vmem>>, %arg2: memref<50x32xf32, #tpu.memory_space<vmem>>, %arg3: memref<8x7xi32, #tpu.memory_space<vmem>>, %arg4: memref<1x8x128xf32, #tpu.memory_space<vmem>>) attributes {dimension_semantics = [#tpu.dimension_semantics<parallel>], iteration_bounds = array<i64: 1>, scalar_prefetch = 0 : i64, scratch_operands = 0 : i64, tpu.core_type = #tpu.core_type<tc>, window_params = [{pipeline_mode = #tpu.pipeline_mode<synchronous>, transform_indices = @transform_0, window_bounds = array<i64: 50, 32>}, {pipeline_mode = #tpu.pipeline_mode<synchronous>, transform_indices = @transform_1, window_bounds = array<i64: 50, 32>}, {transform_indices = @transform_2, window_bounds = array<i64: 8, 7>}, {transform_indices = @transform_3, window_bounds = array<i64: 1, 8, 128>}]} {
    %c0 = arith.constant 0 : index
    %c0_0 = arith.constant 0 : index
    %0 = vector.load %arg1[%c0, %c0_0] : memref<50x32xf32, #tpu.memory_space<vmem>>, vector<50x32xf32>
    %c0_1 = arith.constant 0 : index
    %c0_2 = arith.constant 0 : index
    %1 = vector.load %arg2[%c0_1, %c0_2] : memref<50x32xf32, #tpu.memory_space<vmem>>, vector<50x32xf32>
    %c0_3 = arith.constant 0 : index
    %c0_4 = arith.constant 0 : index
    %2 = vector.load %arg3[%c0_3, %c0_4] : memref<8x7xi32, #tpu.memory_space<vmem>>, vector<8x7xi32>
    %3 = tpu.iota {dimensions = array<i32: 1>} : vector<8x50xi32>
    %4 = vector.extract_strided_slice %2 {offsets = [0, 0], sizes = [8, 1], strides = [1, 1]} : vector<8x7xi32> to vector<8x1xi32>
    %5 = vector.broadcast %4 : vector<8x1xi32> to vector<8x50xi32>
    %6 = arith.cmpi eq, %3, %5 : vector<8x50xi32>
    %7 = arith.extui %6 : vector<8x50xi1> to vector<8x50xi32>
    %8 = arith.sitofp %7 : vector<8x50xi32> to vector<8x50xf32>
    %cst = arith.constant dense<0.000000e+00> : vector<8x32xf32>
    %9 = tpu.matmul %8, %0, %cst {dimension_numbers = #tpu.dot_dimension_numbers<[1], [0], [0], [1], [0, 0, 1, 1], [], []>} : vector<8x50xf32>, vector<50x32xf32>, vector<8x32xf32> -> vector<8x32xf32>
    %cst_5 = arith.constant 0.000000e+00 : f32
    %10 = vector.broadcast %cst_5 : f32 to vector<8x1xf32>
    %11 = vector.extract_strided_slice %2 {offsets = [0, 1], sizes = [8, 1], strides = [1, 1]} : vector<8x7xi32> to vector<8x1xi32>
    %12 = vector.broadcast %11 : vector<8x1xi32> to vector<8x50xi32>
    %13 = arith.cmpi eq, %3, %12 : vector<8x50xi32>
    %14 = arith.extui %13 : vector<8x50xi1> to vector<8x50xi32>
    %15 = arith.sitofp %14 : vector<8x50xi32> to vector<8x50xf32>
    %cst_6 = arith.constant dense<0.000000e+00> : vector<8x32xf32>
    %16 = tpu.matmul %15, %1, %cst_6 {dimension_numbers = #tpu.dot_dimension_numbers<[1], [0], [0], [1], [0, 0, 1, 1], [], []>} : vector<8x50xf32>, vector<50x32xf32>, vector<8x32xf32> -> vector<8x32xf32>
    %17 = arith.mulf %16, %9 : vector<8x32xf32>
    %cst_7 = arith.constant dense<0.000000e+00> : vector<8xf32>
    %18 = vector.multi_reduction <add>, %17, %cst_7 [1] : vector<8x32xf32> to vector<8xf32>
    %19 = vector.shape_cast %18 : vector<8xf32> to vector<8x1xf32>
    %cst_8 = arith.constant 0.000000e+00 : f32
    %20 = vector.broadcast %cst_8 : f32 to vector<8x1xf32>
    %21 = arith.minimumf %19, %20 : vector<8x1xf32>
    %22 = math.absf %19 : vector<8x1xf32>
    %cst_9 = arith.constant 0.000000e+00 : f32
    %23 = vector.broadcast %cst_9 : f32 to vector<8x1xf32>
    %24 = arith.subf %23, %22 : vector<8x1xf32>
    %25 = math.exp %24 : vector<8x1xf32>
    %26 = math.log1p %25 : vector<8x1xf32>
    %27 = arith.subf %21, %26 : vector<8x1xf32>
    %28 = arith.addf %10, %27 : vector<8x1xf32>
    %29 = vector.extract_strided_slice %2 {offsets = [0, 2], sizes = [8, 1], strides = [1, 1]} : vector<8x7xi32> to vector<8x1xi32>
    %30 = vector.broadcast %29 : vector<8x1xi32> to vector<8x50xi32>
    %31 = arith.cmpi eq, %3, %30 : vector<8x50xi32>
    %32 = arith.extui %31 : vector<8x50xi1> to vector<8x50xi32>
    %33 = arith.sitofp %32 : vector<8x50xi32> to vector<8x50xf32>
    %cst_10 = arith.constant dense<0.000000e+00> : vector<8x32xf32>
    %34 = tpu.matmul %33, %1, %cst_10 {dimension_numbers = #tpu.dot_dimension_numbers<[1], [0], [0], [1], [0, 0, 1, 1], [], []>} : vector<8x50xf32>, vector<50x32xf32>, vector<8x32xf32> -> vector<8x32xf32>
    %35 = arith.mulf %34, %9 : vector<8x32xf32>
    %cst_11 = arith.constant dense<0.000000e+00> : vector<8xf32>
    %36 = vector.multi_reduction <add>, %35, %cst_11 [1] : vector<8x32xf32> to vector<8xf32>
    %37 = vector.shape_cast %36 : vector<8xf32> to vector<8x1xf32>
    %cst_12 = arith.constant 0.000000e+00 : f32
    %38 = vector.broadcast %cst_12 : f32 to vector<8x1xf32>
    %39 = arith.subf %38, %37 : vector<8x1xf32>
    %cst_13 = arith.constant 0.000000e+00 : f32
    %40 = vector.broadcast %cst_13 : f32 to vector<8x1xf32>
    %41 = arith.minimumf %39, %40 : vector<8x1xf32>
    %42 = math.absf %39 : vector<8x1xf32>
    %cst_14 = arith.constant 0.000000e+00 : f32
    %43 = vector.broadcast %cst_14 : f32 to vector<8x1xf32>
    %44 = arith.subf %43, %42 : vector<8x1xf32>
    %45 = math.exp %44 : vector<8x1xf32>
    %46 = math.log1p %45 : vector<8x1xf32>
    %47 = arith.subf %41, %46 : vector<8x1xf32>
    %48 = arith.addf %28, %47 : vector<8x1xf32>
    %49 = vector.extract_strided_slice %2 {offsets = [0, 3], sizes = [8, 1], strides = [1, 1]} : vector<8x7xi32> to vector<8x1xi32>
    %50 = vector.broadcast %49 : vector<8x1xi32> to vector<8x50xi32>
    %51 = arith.cmpi eq, %3, %50 : vector<8x50xi32>
    %52 = arith.extui %51 : vector<8x50xi1> to vector<8x50xi32>
    %53 = arith.sitofp %52 : vector<8x50xi32> to vector<8x50xf32>
    %cst_15 = arith.constant dense<0.000000e+00> : vector<8x32xf32>
    %54 = tpu.matmul %53, %1, %cst_15 {dimension_numbers = #tpu.dot_dimension_numbers<[1], [0], [0], [1], [0, 0, 1, 1], [], []>} : vector<8x50xf32>, vector<50x32xf32>, vector<8x32xf32> -> vector<8x32xf32>
    %55 = arith.mulf %54, %9 : vector<8x32xf32>
    %cst_16 = arith.constant dense<0.000000e+00> : vector<8xf32>
    %56 = vector.multi_reduction <add>, %55, %cst_16 [1] : vector<8x32xf32> to vector<8xf32>
    %57 = vector.shape_cast %56 : vector<8xf32> to vector<8x1xf32>
    %cst_17 = arith.constant 0.000000e+00 : f32
    %58 = vector.broadcast %cst_17 : f32 to vector<8x1xf32>
    %59 = arith.subf %58, %57 : vector<8x1xf32>
    %cst_18 = arith.constant 0.000000e+00 : f32
    %60 = vector.broadcast %cst_18 : f32 to vector<8x1xf32>
    %61 = arith.minimumf %59, %60 : vector<8x1xf32>
    %62 = math.absf %59 : vector<8x1xf32>
    %cst_19 = arith.constant 0.000000e+00 : f32
    %63 = vector.broadcast %cst_19 : f32 to vector<8x1xf32>
    %64 = arith.subf %63, %62 : vector<8x1xf32>
    %65 = math.exp %64 : vector<8x1xf32>
    %66 = math.log1p %65 : vector<8x1xf32>
    %67 = arith.subf %61, %66 : vector<8x1xf32>
    %68 = arith.addf %48, %67 : vector<8x1xf32>
    %69 = vector.extract_strided_slice %2 {offsets = [0, 4], sizes = [8, 1], strides = [1, 1]} : vector<8x7xi32> to vector<8x1xi32>
    %70 = vector.broadcast %69 : vector<8x1xi32> to vector<8x50xi32>
    %71 = arith.cmpi eq, %3, %70 : vector<8x50xi32>
    %72 = arith.extui %71 : vector<8x50xi1> to vector<8x50xi32>
    %73 = arith.sitofp %72 : vector<8x50xi32> to vector<8x50xf32>
    %cst_20 = arith.constant dense<0.000000e+00> : vector<8x32xf32>
    %74 = tpu.matmul %73, %1, %cst_20 {dimension_numbers = #tpu.dot_dimension_numbers<[1], [0], [0], [1], [0, 0, 1, 1], [], []>} : vector<8x50xf32>, vector<50x32xf32>, vector<8x32xf32> -> vector<8x32xf32>
    %75 = arith.mulf %74, %9 : vector<8x32xf32>
    %cst_21 = arith.constant dense<0.000000e+00> : vector<8xf32>
    %76 = vector.multi_reduction <add>, %75, %cst_21 [1] : vector<8x32xf32> to vector<8xf32>
    %77 = vector.shape_cast %76 : vector<8xf32> to vector<8x1xf32>
    %cst_22 = arith.constant 0.000000e+00 : f32
    %78 = vector.broadcast %cst_22 : f32 to vector<8x1xf32>
    %79 = arith.subf %78, %77 : vector<8x1xf32>
    %cst_23 = arith.constant 0.000000e+00 : f32
    %80 = vector.broadcast %cst_23 : f32 to vector<8x1xf32>
    %81 = arith.minimumf %79, %80 : vector<8x1xf32>
    %82 = math.absf %79 : vector<8x1xf32>
    %cst_24 = arith.constant 0.000000e+00 : f32
    %83 = vector.broadcast %cst_24 : f32 to vector<8x1xf32>
    %84 = arith.subf %83, %82 : vector<8x1xf32>
    %85 = math.exp %84 : vector<8x1xf32>
    %86 = math.log1p %85 : vector<8x1xf32>
    %87 = arith.subf %81, %86 : vector<8x1xf32>
    %88 = arith.addf %68, %87 : vector<8x1xf32>
    %89 = vector.extract_strided_slice %2 {offsets = [0, 5], sizes = [8, 1], strides = [1, 1]} : vector<8x7xi32> to vector<8x1xi32>
    %90 = vector.broadcast %89 : vector<8x1xi32> to vector<8x50xi32>
    %91 = arith.cmpi eq, %3, %90 : vector<8x50xi32>
    %92 = arith.extui %91 : vector<8x50xi1> to vector<8x50xi32>
    %93 = arith.sitofp %92 : vector<8x50xi32> to vector<8x50xf32>
    %cst_25 = arith.constant dense<0.000000e+00> : vector<8x32xf32>
    %94 = tpu.matmul %93, %1, %cst_25 {dimension_numbers = #tpu.dot_dimension_numbers<[1], [0], [0], [1], [0, 0, 1, 1], [], []>} : vector<8x50xf32>, vector<50x32xf32>, vector<8x32xf32> -> vector<8x32xf32>
    %95 = arith.mulf %94, %9 : vector<8x32xf32>
    %cst_26 = arith.constant dense<0.000000e+00> : vector<8xf32>
    %96 = vector.multi_reduction <add>, %95, %cst_26 [1] : vector<8x32xf32> to vector<8xf32>
    %97 = vector.shape_cast %96 : vector<8xf32> to vector<8x1xf32>
    %cst_27 = arith.constant 0.000000e+00 : f32
    %98 = vector.broadcast %cst_27 : f32 to vector<8x1xf32>
    %99 = arith.subf %98, %97 : vector<8x1xf32>
    %cst_28 = arith.constant 0.000000e+00 : f32
    %100 = vector.broadcast %cst_28 : f32 to vector<8x1xf32>
    %101 = arith.minimumf %99, %100 : vector<8x1xf32>
    %102 = math.absf %99 : vector<8x1xf32>
    %cst_29 = arith.constant 0.000000e+00 : f32
    %103 = vector.broadcast %cst_29 : f32 to vector<8x1xf32>
    %104 = arith.subf %103, %102 : vector<8x1xf32>
    %105 = math.exp %104 : vector<8x1xf32>
    %106 = math.log1p %105 : vector<8x1xf32>
    %107 = arith.subf %101, %106 : vector<8x1xf32>
    %108 = arith.addf %88, %107 : vector<8x1xf32>
    %109 = vector.extract_strided_slice %2 {offsets = [0, 6], sizes = [8, 1], strides = [1, 1]} : vector<8x7xi32> to vector<8x1xi32>
    %110 = vector.broadcast %109 : vector<8x1xi32> to vector<8x50xi32>
    %111 = arith.cmpi eq, %3, %110 : vector<8x50xi32>
    %112 = arith.extui %111 : vector<8x50xi1> to vector<8x50xi32>
    %113 = arith.sitofp %112 : vector<8x50xi32> to vector<8x50xf32>
    %cst_30 = arith.constant dense<0.000000e+00> : vector<8x32xf32>
    %114 = tpu.matmul %113, %1, %cst_30 {dimension_numbers = #tpu.dot_dimension_numbers<[1], [0], [0], [1], [0, 0, 1, 1], [], []>} : vector<8x50xf32>, vector<50x32xf32>, vector<8x32xf32> -> vector<8x32xf32>
    %115 = arith.mulf %114, %9 : vector<8x32xf32>
    %cst_31 = arith.constant dense<0.000000e+00> : vector<8xf32>
    %116 = vector.multi_reduction <add>, %115, %cst_31 [1] : vector<8x32xf32> to vector<8xf32>
    %117 = vector.shape_cast %116 : vector<8xf32> to vector<8x1xf32>
    %cst_32 = arith.constant 0.000000e+00 : f32
    %118 = vector.broadcast %cst_32 : f32 to vector<8x1xf32>
    %119 = arith.subf %118, %117 : vector<8x1xf32>
    %cst_33 = arith.constant 0.000000e+00 : f32
    %120 = vector.broadcast %cst_33 : f32 to vector<8x1xf32>
    %121 = arith.minimumf %119, %120 : vector<8x1xf32>
    %122 = math.absf %119 : vector<8x1xf32>
    %cst_34 = arith.constant 0.000000e+00 : f32
    %123 = vector.broadcast %cst_34 : f32 to vector<8x1xf32>
    %124 = arith.subf %123, %122 : vector<8x1xf32>
    %125 = math.exp %124 : vector<8x1xf32>
    %126 = math.log1p %125 : vector<8x1xf32>
    %127 = arith.subf %121, %126 : vector<8x1xf32>
    %128 = arith.addf %108, %127 : vector<8x1xf32>
    %c8_i32 = arith.constant 8 : i32
    %129 = arith.muli %arg0, %c8_i32 : i32
    %130 = tpu.iota {dimensions = array<i32: 0>} : vector<8x1xi32>
    %131 = vector.broadcast %129 : i32 to vector<8x1xi32>
    %132 = arith.addi %131, %130 : vector<8x1xi32>
    %c8_i32_35 = arith.constant 8 : i32
    %133 = vector.broadcast %c8_i32_35 : i32 to vector<8x1xi32>
    %134 = arith.cmpi slt, %132, %133 : vector<8x1xi32>
    %cst_36 = arith.constant 0.000000e+00 : f32
    %135 = vector.broadcast %cst_36 : f32 to vector<8x1xf32>
    %136 = arith.select %134, %128, %135 : vector<8x1xi1>, vector<8x1xf32>
    %137 = vector.shape_cast %136 : vector<8x1xf32> to vector<1x8x1xf32>
    %cst_37 = arith.constant dense<0.000000e+00> : vector<1xf32>
    %138 = vector.multi_reduction <add>, %137, %cst_37 [1, 2] : vector<1x8x1xf32> to vector<1xf32>
    %139 = vector.shape_cast %138 : vector<1xf32> to vector<1x1x1xf32>
    %140 = vector.extract %139[0, 0, 0] : f32 from vector<1x1x1xf32>
    %141 = vector.broadcast %140 : f32 to vector<1x8x128xf32>
    %c0_38 = arith.constant 0 : index
    %c0_39 = arith.constant 0 : index
    %c0_40 = arith.constant 0 : index
    %142 = vector.load %arg4[%c0_38, %c0_39, %c0_40] : memref<1x8x128xf32, #tpu.memory_space<vmem>>, vector<1x8x128xf32>
    tpu.vector_store %arg4[%c0_38, %c0_39, %c0_40], %141 {strides = array<i32>} : memref<1x8x128xf32, #tpu.memory_space<vmem>>, vector<1x8x128xf32>,
    return
  }
  func.func @transform_0(%arg0: i32) -> (i32, i32) {
    %c0_i32 = arith.constant 0 : i32
    %c0_i32_0 = arith.constant 0 : i32
    %c0_i32_1 = arith.constant 0 : i32
    return %c0_i32, %c0_i32_0 : i32, i32
  }
  func.func @transform_1(%arg0: i32) -> (i32, i32) {
    %c0_i32 = arith.constant 0 : i32
    %c0_i32_0 = arith.constant 0 : i32
    %c0_i32_1 = arith.constant 0 : i32
    return %c0_i32, %c0_i32_0 : i32, i32
  }
  func.func @transform_2(%arg0: i32) -> (i32, i32) {
    %c0_i32 = arith.constant 0 : i32
    %c0_i32_0 = arith.constant 0 : i32
    return %arg0, %c0_i32 : i32, i32
  }
  func.func @transform_3(%arg0: i32) -> (i32, i32, i32) {
    %c0_i32 = arith.constant 0 : i32
    %c0_i32_0 = arith.constant 0 : i32
    %c0_i32_1 = arith.constant 0 : i32
    return %arg0, %c0_i32, %c0_i32_0 : i32, i32, i32
  }
}

module attributes {stable_mosaic.version = 11 : i64} {
  func.func @kernel(%arg0: i32, %arg1: memref<50x32xf32, #tpu.memory_space<vmem>>, %arg2: memref<50x32xf32, #tpu.memory_space<vmem>>, %arg3: memref<8x7xi32, #tpu.memory_space<vmem>>, %arg4: memref<1x8x128xf32, #tpu.memory_space<vmem>>) attributes {dimension_semantics = [#tpu.dimension_semantics<parallel>], iteration_bounds = array<i64: 1>, scalar_prefetch = 0 : i64, scratch_operands = 0 : i64, tpu.core_type = #tpu.core_type<tc>, window_params = [{pipeline_mode = #tpu.pipeline_mode<synchronous>, transform_indices = @transform_0, window_bounds = array<i64: 50, 32>}, {pipeline_mode = #tpu.pipeline_mode<synchronous>, transform_indices = @transform_1, window_bounds = array<i64: 50, 32>}, {transform_indices = @transform_2, window_bounds = array<i64: 8, 7>}, {transform_indices = @transform_3, window_bounds = array<i64: 1, 8, 128>}]} {
    %c0 = arith.constant 0 : index
    %c0_0 = arith.constant 0 : index
    %0 = vector.load %arg1[%c0, %c0_0] : memref<50x32xf32, #tpu.memory_space<vmem>>, vector<50x32xf32>
    %c0_1 = arith.constant 0 : index
    %c0_2 = arith.constant 0 : index
    %1 = vector.load %arg2[%c0_1, %c0_2] : memref<50x32xf32, #tpu.memory_space<vmem>>, vector<50x32xf32>
    %c0_3 = arith.constant 0 : index
    %c0_4 = arith.constant 0 : index
    %2 = vector.load %arg3[%c0_3, %c0_4] : memref<8x7xi32, #tpu.memory_space<vmem>>, vector<8x7xi32>
    %3 = tpu.iota {dimensions = array<i32: 1>} : vector<8x50xi32>
    %4 = vector.extract_strided_slice %2 {offsets = [0, 0], sizes = [8, 1], strides = [1, 1]} : vector<8x7xi32> to vector<8x1xi32>
    %5 = vector.broadcast %4 : vector<8x1xi32> to vector<8x50xi32>
    %6 = arith.cmpi eq, %3, %5 : vector<8x50xi32>
    %7 = arith.extui %6 : vector<8x50xi1> to vector<8x50xi32>
    %8 = arith.sitofp %7 : vector<8x50xi32> to vector<8x50xf32>
    %cst = arith.constant dense<0.000000e+00> : vector<8x32xf32>
    %9 = tpu.matmul %8, %0, %cst {dimension_numbers = #tpu.dot_dimension_numbers<[1], [0], [0], [1], [0, 0, 1, 1], [], []>} : vector<8x50xf32>, vector<50x32xf32>, vector<8x32xf32> -> vector<8x32xf32>
    %cst_5 = arith.constant 0.000000e+00 : f32
    %10 = vector.broadcast %cst_5 : f32 to vector<8x1xf32>
    %11 = vector.extract_strided_slice %2 {offsets = [0, 1], sizes = [8, 1], strides = [1, 1]} : vector<8x7xi32> to vector<8x1xi32>
    %12 = vector.broadcast %11 : vector<8x1xi32> to vector<8x50xi32>
    %13 = arith.cmpi eq, %3, %12 : vector<8x50xi32>
    %14 = arith.extui %13 : vector<8x50xi1> to vector<8x50xi32>
    %15 = arith.sitofp %14 : vector<8x50xi32> to vector<8x50xf32>
    %cst_6 = arith.constant dense<0.000000e+00> : vector<8x32xf32>
    %16 = tpu.matmul %15, %1, %cst_6 {dimension_numbers = #tpu.dot_dimension_numbers<[1], [0], [0], [1], [0, 0, 1, 1], [], []>} : vector<8x50xf32>, vector<50x32xf32>, vector<8x32xf32> -> vector<8x32xf32>
    %17 = arith.mulf %16, %9 : vector<8x32xf32>
    %cst_7 = arith.constant dense<0.000000e+00> : vector<8xf32>
    %18 = vector.multi_reduction <add>, %17, %cst_7 [1] : vector<8x32xf32> to vector<8xf32>
    %19 = vector.shape_cast %18 : vector<8xf32> to vector<8x1xf32>
    %cst_8 = arith.constant 0.000000e+00 : f32
    %20 = vector.broadcast %cst_8 : f32 to vector<8x1xf32>
    %21 = arith.minimumf %19, %20 : vector<8x1xf32>
    %22 = math.absf %19 : vector<8x1xf32>
    %cst_9 = arith.constant 0.000000e+00 : f32
    %23 = vector.broadcast %cst_9 : f32 to vector<8x1xf32>
    %24 = arith.subf %23, %22 : vector<8x1xf32>
    %25 = math.exp %24 : vector<8x1xf32>
    %26 = math.log1p %25 : vector<8x1xf32>
    %27 = arith.subf %21, %26 : vector<8x1xf32>
    %28 = arith.addf %10, %27 : vector<8x1xf32>
    %29 = vector.extract_strided_slice %2 {offsets = [0, 2], sizes = [8, 1], strides = [1, 1]} : vector<8x7xi32> to vector<8x1xi32>
    %30 = vector.broadcast %29 : vector<8x1xi32> to vector<8x50xi32>
    %31 = arith.cmpi eq, %3, %30 : vector<8x50xi32>
    %32 = arith.extui %31 : vector<8x50xi1> to vector<8x50xi32>
    %33 = arith.sitofp %32 : vector<8x50xi32> to vector<8x50xf32>
    %cst_10 = arith.constant dense<0.000000e+00> : vector<8x32xf32>
    %34 = tpu.matmul %33, %1, %cst_10 {dimension_numbers = #tpu.dot_dimension_numbers<[1], [0], [0], [1], [0, 0, 1, 1], [], []>} : vector<8x50xf32>, vector<50x32xf32>, vector<8x32xf32> -> vector<8x32xf32>
    %35 = arith.mulf %34, %9 : vector<8x32xf32>
    %cst_11 = arith.constant dense<0.000000e+00> : vector<8xf32>
    %36 = vector.multi_reduction <add>, %35, %cst_11 [1] : vector<8x32xf32> to vector<8xf32>
    %37 = vector.shape_cast %36 : vector<8xf32> to vector<8x1xf32>
    %cst_12 = arith.constant 0.000000e+00 : f32
    %38 = vector.broadcast %cst_12 : f32 to vector<8x1xf32>
    %39 = arith.subf %38, %37 : vector<8x1xf32>
    %cst_13 = arith.constant 0.000000e+00 : f32
    %40 = vector.broadcast %cst_13 : f32 to vector<8x1xf32>
    %41 = arith.minimumf %39, %40 : vector<8x1xf32>
    %42 = math.absf %39 : vector<8x1xf32>
    %cst_14 = arith.constant 0.000000e+00 : f32
    %43 = vector.broadcast %cst_14 : f32 to vector<8x1xf32>
    %44 = arith.subf %43, %42 : vector<8x1xf32>
    %45 = math.exp %44 : vector<8x1xf32>
    %46 = math.log1p %45 : vector<8x1xf32>
    %47 = arith.subf %41, %46 : vector<8x1xf32>
    %48 = arith.addf %28, %47 : vector<8x1xf32>
    %49 = vector.extract_strided_slice %2 {offsets = [0, 3], sizes = [8, 1], strides = [1, 1]} : vector<8x7xi32> to vector<8x1xi32>
    %50 = vector.broadcast %49 : vector<8x1xi32> to vector<8x50xi32>
    %51 = arith.cmpi eq, %3, %50 : vector<8x50xi32>
    %52 = arith.extui %51 : vector<8x50xi1> to vector<8x50xi32>
    %53 = arith.sitofp %52 : vector<8x50xi32> to vector<8x50xf32>
    %cst_15 = arith.constant dense<0.000000e+00> : vector<8x32xf32>
    %54 = tpu.matmul %53, %1, %cst_15 {dimension_numbers = #tpu.dot_dimension_numbers<[1], [0], [0], [1], [0, 0, 1, 1], [], []>} : vector<8x50xf32>, vector<50x32xf32>, vector<8x32xf32> -> vector<8x32xf32>
    %55 = arith.mulf %54, %9 : vector<8x32xf32>
    %cst_16 = arith.constant dense<0.000000e+00> : vector<8xf32>
    %56 = vector.multi_reduction <add>, %55, %cst_16 [1] : vector<8x32xf32> to vector<8xf32>
    %57 = vector.shape_cast %56 : vector<8xf32> to vector<8x1xf32>
    %cst_17 = arith.constant 0.000000e+00 : f32
    %58 = vector.broadcast %cst_17 : f32 to vector<8x1xf32>
    %59 = arith.subf %58, %57 : vector<8x1xf32>
    %cst_18 = arith.constant 0.000000e+00 : f32
    %60 = vector.broadcast %cst_18 : f32 to vector<8x1xf32>
    %61 = arith.minimumf %59, %60 : vector<8x1xf32>
    %62 = math.absf %59 : vector<8x1xf32>
    %cst_19 = arith.constant 0.000000e+00 : f32
    %63 = vector.broadcast %cst_19 : f32 to vector<8x1xf32>
    %64 = arith.subf %63, %62 : vector<8x1xf32>
    %65 = math.exp %64 : vector<8x1xf32>
    %66 = math.log1p %65 : vector<8x1xf32>
    %67 = arith.subf %61, %66 : vector<8x1xf32>
    %68 = arith.addf %48, %67 : vector<8x1xf32>
    %69 = vector.extract_strided_slice %2 {offsets = [0, 4], sizes = [8, 1], strides = [1, 1]} : vector<8x7xi32> to vector<8x1xi32>
    %70 = vector.broadcast %69 : vector<8x1xi32> to vector<8x50xi32>
    %71 = arith.cmpi eq, %3, %70 : vector<8x50xi32>
    %72 = arith.extui %71 : vector<8x50xi1> to vector<8x50xi32>
    %73 = arith.sitofp %72 : vector<8x50xi32> to vector<8x50xf32>
    %cst_20 = arith.constant dense<0.000000e+00> : vector<8x32xf32>
    %74 = tpu.matmul %73, %1, %cst_20 {dimension_numbers = #tpu.dot_dimension_numbers<[1], [0], [0], [1], [0, 0, 1, 1], [], []>} : vector<8x50xf32>, vector<50x32xf32>, vector<8x32xf32> -> vector<8x32xf32>
    %75 = arith.mulf %74, %9 : vector<8x32xf32>
    %cst_21 = arith.constant dense<0.000000e+00> : vector<8xf32>
    %76 = vector.multi_reduction <add>, %75, %cst_21 [1] : vector<8x32xf32> to vector<8xf32>
    %77 = vector.shape_cast %76 : vector<8xf32> to vector<8x1xf32>
    %cst_22 = arith.constant 0.000000e+00 : f32
    %78 = vector.broadcast %cst_22 : f32 to vector<8x1xf32>
    %79 = arith.subf %78, %77 : vector<8x1xf32>
    %cst_23 = arith.constant 0.000000e+00 : f32
    %80 = vector.broadcast %cst_23 : f32 to vector<8x1xf32>
    %81 = arith.minimumf %79, %80 : vector<8x1xf32>
    %82 = math.absf %79 : vector<8x1xf32>
    %cst_24 = arith.constant 0.000000e+00 : f32
    %83 = vector.broadcast %cst_24 : f32 to vector<8x1xf32>
    %84 = arith.subf %83, %82 : vector<8x1xf32>
    %85 = math.exp %84 : vector<8x1xf32>
    %86 = math.log1p %85 : vector<8x1xf32>
    %87 = arith.subf %81, %86 : vector<8x1xf32>
    %88 = arith.addf %68, %87 : vector<8x1xf32>
    %89 = vector.extract_strided_slice %2 {offsets = [0, 5], sizes = [8, 1], strides = [1, 1]} : vector<8x7xi32> to vector<8x1xi32>
    %90 = vector.broadcast %89 : vector<8x1xi32> to vector<8x50xi32>
    %91 = arith.cmpi eq, %3, %90 : vector<8x50xi32>
    %92 = arith.extui %91 : vector<8x50xi1> to vector<8x50xi32>
    %93 = arith.sitofp %92 : vector<8x50xi32> to vector<8x50xf32>
    %cst_25 = arith.constant dense<0.000000e+00> : vector<8x32xf32>
    %94 = tpu.matmul %93, %1, %cst_25 {dimension_numbers = #tpu.dot_dimension_numbers<[1], [0], [0], [1], [0, 0, 1, 1], [], []>} : vector<8x50xf32>, vector<50x32xf32>, vector<8x32xf32> -> vector<8x32xf32>
    %95 = arith.mulf %94, %9 : vector<8x32xf32>
    %cst_26 = arith.constant dense<0.000000e+00> : vector<8xf32>
    %96 = vector.multi_reduction <add>, %95, %cst_26 [1] : vector<8x32xf32> to vector<8xf32>
    %97 = vector.shape_cast %96 : vector<8xf32> to vector<8x1xf32>
    %cst_27 = arith.constant 0.000000e+00 : f32
    %98 = vector.broadcast %cst_27 : f32 to vector<8x1xf32>
    %99 = arith.subf %98, %97 : vector<8x1xf32>
    %cst_28 = arith.constant 0.000000e+00 : f32
    %100 = vector.broadcast %cst_28 : f32 to vector<8x1xf32>
    %101 = arith.minimumf %99, %100 : vector<8x1xf32>
    %102 = math.absf %99 : vector<8x1xf32>
    %cst_29 = arith.constant 0.000000e+00 : f32
    %103 = vector.broadcast %cst_29 : f32 to vector<8x1xf32>
    %104 = arith.subf %103, %102 : vector<8x1xf32>
    %105 = math.exp %104 : vector<8x1xf32>
    %106 = math.log1p %105 : vector<8x1xf32>
    %107 = arith.subf %101, %106 : vector<8x1xf32>
    %108 = arith.addf %88, %107 : vector<8x1xf32>
    %109 = vector.extract_strided_slice %2 {offsets = [0, 6], sizes = [8, 1], strides = [1, 1]} : vector<8x7xi32> to vector<8x1xi32>
    %110 = vector.broadcast %109 : vector<8x1xi32> to vector<8x50xi32>
    %111 = arith.cmpi eq, %3, %110 : vector<8x50xi32>
    %112 = arith.extui %111 : vector<8x50xi1> to vector<8x50xi32>
    %113 = arith.sitofp %112 : vector<8x50xi32> to vector<8x50xf32>
    %cst_30 = arith.constant dense<0.000000e+00> : vector<8x32xf32>
    %114 = tpu.matmul %113, %1, %cst_30 {dimension_numbers = #tpu.dot_dimension_numbers<[1], [0], [0], [1], [0, 0, 1, 1], [], []>} : vector<8x50xf32>, vector<50x32xf32>, vector<8x32xf32> -> vector<8x32xf32>
    %115 = arith.mulf %114, %9 : vector<8x32xf32>
    %cst_31 = arith.constant dense<0.000000e+00> : vector<8xf32>
    %116 = vector.multi_reduction <add>, %115, %cst_31 [1] : vector<8x32xf32> to vector<8xf32>
    %117 = vector.shape_cast %116 : vector<8xf32> to vector<8x1xf32>
    %cst_32 = arith.constant 0.000000e+00 : f32
    %118 = vector.broadcast %cst_32 : f32 to vector<8x1xf32>
    %119 = arith.subf %118, %117 : vector<8x1xf32>
    %cst_33 = arith.constant 0.000000e+00 : f32
    %120 = vector.broadcast %cst_33 : f32 to vector<8x1xf32>
    %121 = arith.minimumf %119, %120 : vector<8x1xf32>
    %122 = math.absf %119 : vector<8x1xf32>
    %cst_34 = arith.constant 0.000000e+00 : f32
    %123 = vector.broadcast %cst_34 : f32 to vector<8x1xf32>
    %124 = arith.subf %123, %122 : vector<8x1xf32>
    %125 = math.exp %124 : vector<8x1xf32>
    %126 = math.log1p %125 : vector<8x1xf32>
    %127 = arith.subf %121, %126 : vector<8x1xf32>
    %128 = arith.addf %108, %127 : vector<8x1xf32>
    %c8_i32 = arith.constant 8 : i32
    %129 = arith.muli %arg0, %c8_i32 : i32
    %130 = tpu.iota {dimensions = array<i32: 0>} : vector<8x1xi32>
    %131 = vector.broadcast %129 : i32 to vector<8x1xi32>
    %132 = arith.addi %131, %130 : vector<8x1xi32>
    %c8_i32_35 = arith.constant 8 : i32
    %133 = vector.broadcast %c8_i32_35 : i32 to vector<8x1xi32>
    %134 = arith.cmpi slt, %132, %133 : vector<8x1xi32>
    %cst_36 = arith.constant 0.000000e+00 : f32
    %135 = vector.broadcast %cst_36 : f32 to vector<8x1xf32>
    %136 = arith.select %134, %128, %135 : vector<8x1xi1>, vector<8x1xf32>
    %137 = vector.shape_cast %136 : vector<8x1xf32> to vector<1x8x1xf32>
    %cst_37 = arith.constant dense<0.000000e+00> : vector<1xf32>
    %138 = vector.multi_reduction <add>, %137, %cst_37 [1, 2] : vector<1x8x1xf32> to vector<1xf32>
    %139 = vector.shape_cast %138 : vector<1xf32> to vector<1x1x1xf32>
    %140 = vector.extract %139[0, 0, 0] : f32 from vector<1x1x1xf32>
    %141 = vector.broadcast %140 : f32 to vector<1x8x128xf32>
    %c0_38 = arith.constant 0 : index
    %c0_39 = arith.constant 0 : index
    %c0_40 = arith.constant 0 : index
    %142 = vector.load %arg4[%c0_38, %c0_39, %c0_40] : memref<1x8x128xf32, #tpu.memory_space<vmem>>, vector<1x8x128xf32>
    tpu.vector_store %arg4[%c0_38, %c0_39, %c0_40], %141 {strides = array<i32>} : memref<1x8x128xf32, #tpu.memory_space<vmem>>, vector<1x8x128xf32>,
    return
  }
  func.func @transform_0(%arg0: i32) -> (i32, i32) {
    %c0_i32 = arith.constant 0 : i32
    %c0_i32_0 = arith.constant 0 : i32
    %c0_i32_1 = arith.constant 0 : i32
    return %c0_i32, %c0_i32_0 : i32, i32
  }
  func.func @transform_1(%arg0: i32) -> (i32, i32) {
    %c0_i32 = arith.constant 0 : i32
    %c0_i32_0 = arith.constant 0 : i32
    %c0_i32_1 = arith.constant 0 : i32
    return %c0_i32, %c0_i32_0 : i32, i32
  }
  func.func @transform_2(%arg0: i32) -> (i32, i32) {
    %c0_i32 = arith.constant 0 : i32
    %c0_i32_0 = arith.constant 0 : i32
    return %arg0, %c0_i32 : i32, i32
  }
  func.func @transform_3(%arg0: i32) -> (i32, i32, i32) {
    %c0_i32 = arith.constant 0 : i32
    %c0_i32_0 = arith.constant 0 : i32
    %c0_i32_1 = arith.constant 0 : i32
    return %arg0, %c0_i32, %c0_i32_0 : i32, i32, i32
  }
}

</mosaic_0001>

<llo_original>
// kernel: tpu_custom_call.1
$region0: #{tpu_custom_call.1}
  #allocation0 [shape = 'u32[]', space=smem, size = 0x4, offset = 0x4, fixed_abs, tag = 'smem constant byte address 0x4 - core index']
  #allocation1 [shape = 'u32[144,128]{1,0:T(1,128)}', space=vmem, size = 0x12000, scoped, tag = 'internal scratch']
  %s0 = inlined_call_operand.vmem [shape: f32[50,32], index: 0, kind: input, shape index: {}]
  %s1 = inlined_call_operand.vmem [shape: f32[50,32], index: 1, kind: input, shape index: {}]
  %s2 = inlined_call_operand.vmem [shape: s32[8,7], index: 2, kind: input, shape index: {}]
  %s3 = inlined_call_operand.hbm [shape: f32[1,8,128], index: 3, kind: output, shape index: {}]
  %s4 = sld [smem:[#allocation0]]
  $region22: #{tpu_custom_call.1} parent=0
    _
  %s6 = ssub.s32 1, %s4
  %s7 = scalar_select 0, %s6, %s4
  $region1: #{tpu_custom_call.1} parent=0
    #allocation2 [shape = 'u8[4096]{0}', space=vmem, size = 0x1000, scoped, tag = 'output window, operand 0, single buffered']
    #allocation3 [shape = 's32[1]{0}', space=sflag, size = 0x4, scoped, tag = 'scoped memory for tpu_custom_call.1']
    %8 = vsyncpa [#allocation3], 0
    // Predicated region
    $region2: #{tpu_custom_call.1} parent=1 // pred_check
      _
    $region3: #{tpu_custom_call.1} parent=1 // pred_check_branch
      %10 = sbr.rel (0) target = $region5
    $region4: #{tpu_custom_call.1} parent=1 // pred_region
      _
    $region5: #{tpu_custom_call.1} parent=1 // pred_fallthru
      _
    // Predicated region
    $region6: #{tpu_custom_call.1} parent=1 // pred_check
      _
    $region7: #{tpu_custom_call.1} parent=1 // pred_check_branch
      %12 = sbr.rel (0) target = $region9
    $region8: #{tpu_custom_call.1} parent=1 // pred_region
      _
    $region9: #{tpu_custom_call.1} parent=1 // pred_fallthru
      _
    // Predicated region
    $region10: #{tpu_custom_call.1} parent=1 // pred_check
      _
    $region11: #{tpu_custom_call.1} parent=1 // pred_check_branch
      %14 = sbr.rel (0) target = $region13
    $region12: #{tpu_custom_call.1} parent=1 // pred_region
      _
    $region13: #{tpu_custom_call.1} parent=1 // pred_fallthru
      _
    %v15 = vld [vmem:[%s0] sm:$0xff]
    %v16 = vld [vmem:[%s0 + $0x8] sm:$0xff]
    %v17 = vld [vmem:[%s0 + $0x10] sm:$0xff]
    %v18 = vld [vmem:[%s0 + $0x18] sm:$0xff]
    %v19 = vld [vmem:[%s0 + $0x20] sm:$0xff]
    %v20 = vld [vmem:[%s0 + $0x28] sm:$0xff]
    %v21 = vld [vmem:[%s0 + $0x30] sm:$0x3]
    %v22 = vld [vmem:[%s1] sm:$0xff]
    %v23 = vld [vmem:[%s1 + $0x8] sm:$0xff]
    %v24 = vld [vmem:[%s1 + $0x10] sm:$0xff]
    %v25 = vld [vmem:[%s1 + $0x18] sm:$0xff]
    %v26 = vld [vmem:[%s1 + $0x20] sm:$0xff]
    %v27 = vld [vmem:[%s1 + $0x28] sm:$0xff]
    %v28 = vld [vmem:[%s1 + $0x30] sm:$0x3]
    %v29 = vld [vmem:[%s2] sm:$0xff]
    %v30 = vlaneseq
    %v31 = vand.u32 %v30, 127
    %32 = vset.pattern.permute.xlu0 0
    %33 = vperm.xlu0 %32, %v29
    %v34 = vpop.permute.xlu0 %33
    %vm35 = vcmp.eq.s32.totalorder %v31, %v34
    %v36 = vsel %vm35, 1, 0
    %v37 = vcvt.s32.f32 %v36
    %vm38 = vcmask 408576
    %v40 = vsel %vm38, %v37, 0
    %vm42 = vcmask 1041408
    %v44 = vsel %vm42, %v21, 0
    %46 = vmatprep.subr.mxu0 0.0
    %47 = vmatpush1.msra.mxu0 %v15
    %48 = vmatprep.subr.mxu0 0.0
    %49 = vmatpush1.msra.mxu0 %v16
    %50 = vmatprep.subr.mxu0 0.0
    %51 = vmatpush1.msra.mxu0 %v17
    %52 = vmatprep.subr.mxu0 0.0
    %53 = vmatpush1.msra.mxu0 %v18
    %54 = vmatprep.subr.mxu0 0.0
    %55 = vmatpush1.msra.mxu0 %v19
    %56 = vmatprep.subr.mxu0 0.0
    %57 = vmatpush1.msra.mxu0 %v20
    %58 = vmatprep.subr.mxu0 0.0
    %59 = vmatpush1.msra.mxu0 %v44
    %60 = vmatprep.subr.mxu0 0.0
    %61 = vmatpush1.msra.mxu0 0.0
    %62 = vmatprep.subr.mxu0 0.0
    %63 = vmatpush1.msra.mxu0 0.0
    %64 = vmatprep.subr.mxu0 0.0
    %65 = vmatpush1.msra.mxu0 0.0
    %66 = vmatprep.subr.mxu0 0.0
    %67 = vmatpush1.msra.mxu0 0.0
    %68 = vmatprep.subr.mxu0 0.0
    %69 = vmatpush1.msra.mxu0 0.0
    %70 = vmatprep.subr.mxu0 0.0
    %71 = vmatpush1.msra.mxu0 0.0
    %72 = vmatprep.subr.mxu0 0.0
    %73 = vmatpush1.msra.mxu0 0.0
    %74 = vmatprep.subr.mxu0 0.0
    %75 = vmatpush1.msra.mxu0 0.0
    %76 = vmatprep.subr.mxu0 0.0
    %77 = vmatpush1.msra.mxu0 0.0
    %78 = vmatprep.subr.mxu0 0.0
    %79 = vmatpush1.msra.mxu0 0.0
    %80 = vmatprep.subr.mxu0 0.0
    %81 = vmatpush1.msra.mxu0 0.0
    %82 = vmatprep.subr.mxu0 0.0
    %83 = vmatpush1.msra.mxu0 0.0
    %84 = vmatprep.subr.mxu0 0.0
    %85 = vmatpush1.msra.mxu0 0.0
    %86 = vmatprep.subr.mxu0 0.0
    %87 = vmatpush1.msra.mxu0 0.0
    %88 = vmatprep.subr.mxu0 0.0
    %89 = vmatpush1.msra.mxu0 0.0
    %90 = vmatprep.subr.mxu0 0.0
    %91 = vmatpush1.msra.mxu0 0.0
    %92 = vmatprep.subr.mxu0 0.0
    %93 = vmatpush1.msra.mxu0 0.0
    %94 = vmatprep.subr.mxu0 0.0
    %95 = vmatpush1.msra.mxu0 0.0
    %96 = vmatprep.subr.mxu0 0.0
    %97 = vmatpush1.msra.mxu0 0.0
    %98 = vmatprep.subr.mxu0 0.0
    %99 = vmatpush1.msra.mxu0 0.0
    %100 = vmatprep.subr.mxu0 0.0
    %101 = vmatpush1.msra.mxu0 0.0
    %102 = vmatprep.subr.mxu0 0.0
    %103 = vmatpush1.msra.mxu0 0.0
    %104 = vmatprep.subr.mxu0 0.0
    %105 = vmatpush1.msra.mxu0 0.0
    %106 = vmatprep.subr.mxu0 0.0
    %107 = vmatpush1.msra.mxu0 0.0
    %108 = vmatprep.subr.mxu0 0.0
    %109 = vmatpush1.msra.mxu0 0.0
    %110 = vmatprep.mubr.f32.mxu0 0.0
    %111 = vmatmul.mubr.f32.gmra.mrb[0].mxu0 %v40
    %v112 = vpop.f32.mrb[0].mxu0
    %v113 = vadd.f32 0.0, %v112
    %v114 = vpop.f32.mrb[0].mxu0
    %115 = vdwg.mxu0
    %116 = vset.pattern.permute.xlu0 1
    %117 = vperm.xlu0 %116, %v29
    %v118 = vpop.permute.xlu0 %117
    %vm119 = vcmp.eq.s32.totalorder %v31, %v118
    %v120 = vsel %vm119, 1, 0
    %v121 = vcvt.s32.f32 %v120
    %v123 = vsel %vm38, %v121, 0
    %v126 = vsel %vm42, %v28, 0
    %128 = vmatprep.subr.mxu0 0.0
    %129 = vmatpush1.msra.mxu0 %v22
    %130 = vmatprep.subr.mxu0 0.0
    %131 = vmatpush1.msra.mxu0 %v23
    %132 = vmatprep.subr.mxu0 0.0
    %133 = vmatpush1.msra.mxu0 %v24
    %134 = vmatprep.subr.mxu0 0.0
    %135 = vmatpush1.msra.mxu0 %v25
    %136 = vmatprep.subr.mxu0 0.0
    %137 = vmatpush1.msra.mxu0 %v26
    %138 = vmatprep.subr.mxu0 0.0
    %139 = vmatpush1.msra.mxu0 %v27
    %140 = vmatprep.subr.mxu0 0.0
    %141 = vmatpush1.msra.mxu0 %v126
    %142 = vmatprep.subr.mxu0 0.0
    %143 = vmatpush1.msra.mxu0 0.0
    %144 = vmatprep.subr.mxu0 0.0
    %145 = vmatpush1.msra.mxu0 0.0
    %146 = vmatprep.subr.mxu0 0.0
    %147 = vmatpush1.msra.mxu0 0.0
    %148 = vmatprep.subr.mxu0 0.0
    %149 = vmatpush1.msra.mxu0 0.0
    %150 = vmatprep.subr.mxu0 0.0
    %151 = vmatpush1.msra.mxu0 0.0
    %152 = vmatprep.subr.mxu0 0.0
    %153 = vmatpush1.msra.mxu0 0.0
    %154 = vmatprep.subr.mxu0 0.0
    %155 = vmatpush1.msra.mxu0 0.0
    %156 = vmatprep.subr.mxu0 0.0
    %157 = vmatpush1.msra.mxu0 0.0
    %158 = vmatprep.subr.mxu0 0.0
    %159 = vmatpush1.msra.mxu0 0.0
    %160 = vmatprep.subr.mxu0 0.0
    %161 = vmatpush1.msra.mxu0 0.0
    %162 = vmatprep.subr.mxu0 0.0
    %163 = vmatpush1.msra.mxu0 0.0
    %164 = vmatprep.subr.mxu0 0.0
    %165 = vmatpush1.msra.mxu0 0.0
    %166 = vmatprep.subr.mxu0 0.0
    %167 = vmatpush1.msra.mxu0 0.0
    %168 = vmatprep.subr.mxu0 0.0
    %169 = vmatpush1.msra.mxu0 0.0
    %170 = vmatprep.subr.mxu0 0.0
    %171 = vmatpush1.msra.mxu0 0.0
    %172 = vmatprep.subr.mxu0 0.0
    %173 = vmatpush1.msra.mxu0 0.0
    %174 = vmatprep.subr.mxu0 0.0
    %175 = vmatpush1.msra.mxu0 0.0
    %176 = vmatprep.subr.mxu0 0.0
    %177 = vmatpush1.msra.mxu0 0.0
    %178 = vmatprep.subr.mxu0 0.0
    %179 = vmatpush1.msra.mxu0 0.0
    %180 = vmatprep.subr.mxu0 0.0
    %181 = vmatpush1.msra.mxu0 0.0
    %182 = vmatprep.subr.mxu0 0.0
    %183 = vmatpush1.msra.mxu0 0.0
    %184 = vmatprep.subr.mxu0 0.0
    %185 = vmatpush1.msra.mxu0 0.0
    %186 = vmatprep.subr.mxu0 0.0
    %187 = vmatpush1.msra.mxu0 0.0
    %188 = vmatprep.subr.mxu0 0.0
    %189 = vmatpush1.msra.mxu0 0.0
    %190 = vmatprep.subr.mxu0 0.0
    %191 = vmatpush1.msra.mxu0 0.0
    %192 = vmatprep.mubr.f32.mxu0 0.0
    %193 = vmatmul.mubr.f32.gmra.mrb[0].mxu0 %v123
    %v194 = vpop.f32.mrb[0].mxu0
    %v195 = vadd.f32 0.0, %v194
    %v196 = vpop.f32.mrb[0].mxu0
    %197 = vdwg.mxu0
    %v198 = vmul.f32 %v195, %v113
    %vm199 = vcmask 261120
    %v200 = vsel %vm199, %v198, 0.0
    %201 = vadd.xlane.f32.xlu0 %v200
    %v202 = vpop.xlane.xlu0 %201
    %v203 = vmin.f32 %v202, 0.0
    %v204 = vand.u32 2147483647, %v202
    %v205 = vsub.f32 0.0, %v204
    %v206 = vmul.f32 %v205, 1.442695
    %v207 = vpow.pop %v206
    %v208 = vadd.f32 %v207, 1.0
    %v209 = vlog2.pop %v208
    %v210 = vmul.f32 %v209, 0.6931472
    %v211 = vmul.f32 -0.5, %v207
    %v212 = vadd.f32 %v211, 1.0
    %v213 = vmul.f32 %v212, %v207
    %v214 = vand.u32 2147483647, %v207
    %vm215 = vcmp.lt.f32.partialorder %v214, 0.0004427343
    %v216 = vsel %vm215, %v213, %v210
    %v217 = vsub.f32 %v203, %v216
    %v218 = vadd.f32 %v217, 0.0
    %219 = vset.pattern.permute.xlu0 2
    %220 = vperm.xlu0 %219, %v29
    %v221 = vpop.permute.xlu0 %220
    %vm222 = vcmp.eq.s32.totalorder %v31, %v221
    %v223 = vsel %vm222, 1, 0
    %v224 = vcvt.s32.f32 %v223
    %v226 = vsel %vm38, %v224, 0
    %228 = vmatprep.subr.mxu0 0.0
    %229 = vmatpush1.msra.mxu0 %v22
    %230 = vmatprep.subr.mxu0 0.0
    %231 = vmatpush1.msra.mxu0 %v23
    %232 = vmatprep.subr.mxu0 0.0
    %233 = vmatpush1.msra.mxu0 %v24
    %234 = vmatprep.subr.mxu0 0.0
    %235 = vmatpush1.msra.mxu0 %v25
    %236 = vmatprep.subr.mxu0 0.0
    %237 = vmatpush1.msra.mxu0 %v26
    %238 = vmatprep.subr.mxu0 0.0
    %239 = vmatpush1.msra.mxu0 %v27
    %240 = vmatprep.subr.mxu0 0.0
    %241 = vmatpush1.msra.mxu0 %v126
    %242 = vmatprep.subr.mxu0 0.0
    %243 = vmatpush1.msra.mxu0 0.0
    %244 = vmatprep.subr.mxu0 0.0
    %245 = vmatpush1.msra.mxu0 0.0
    %246 = vmatprep.subr.mxu0 0.0
    %247 = vmatpush1.msra.mxu0 0.0
    %248 = vmatprep.subr.mxu0 0.0
    %249 = vmatpush1.msra.mxu0 0.0
    %250 = vmatprep.subr.mxu0 0.0
    %251 = vmatpush1.msra.mxu0 0.0
    %252 = vmatprep.subr.mxu0 0.0
    %253 = vmatpush1.msra.mxu0 0.0
    %254 = vmatprep.subr.mxu0 0.0
    %255 = vmatpush1.msra.mxu0 0.0
    %256 = vmatprep.subr.mxu0 0.0
    %257 = vmatpush1.msra.mxu0 0.0
    %258 = vmatprep.subr.mxu0 0.0
    %259 = vmatpush1.msra.mxu0 0.0
    %260 = vmatprep.subr.mxu0 0.0
    %261 = vmatpush1.msra.mxu0 0.0
    %262 = vmatprep.subr.mxu0 0.0
    %263 = vmatpush1.msra.mxu0 0.0
    %264 = vmatprep.subr.mxu0 0.0
    %265 = vmatpush1.msra.mxu0 0.0
    %266 = vmatprep.subr.mxu0 0.0
    %267 = vmatpush1.msra.mxu0 0.0
    %268 = vmatprep.subr.mxu0 0.0
    %269 = vmatpush1.msra.mxu0 0.0
    %270 = vmatprep.subr.mxu0 0.0
    %271 = vmatpush1.msra.mxu0 0.0
    %272 = vmatprep.subr.mxu0 0.0
    %273 = vmatpush1.msra.mxu0 0.0
    %274 = vmatprep.subr.mxu0 0.0
    %275 = vmatpush1.msra.mxu0 0.0
    %276 = vmatprep.subr.mxu0 0.0
    %277 = vmatpush1.msra.mxu0 0.0
    %278 = vmatprep.subr.mxu0 0.0
    %279 = vmatpush1.msra.mxu0 0.0
    %280 = vmatprep.subr.mxu0 0.0
    %281 = vmatpush1.msra.mxu0 0.0
    %282 = vmatprep.subr.mxu0 0.0
    %283 = vmatpush1.msra.mxu0 0.0
    %284 = vmatprep.subr.mxu0 0.0
    %285 = vmatpush1.msra.mxu0 0.0
    %286 = vmatprep.subr.mxu0 0.0
    %287 = vmatpush1.msra.mxu0 0.0
    %288 = vmatprep.subr.mxu0 0.0
    %289 = vmatpush1.msra.mxu0 0.0
    %290 = vmatprep.subr.mxu0 0.0
    %291 = vmatpush1.msra.mxu0 0.0
    %292 = vmatprep.mubr.f32.mxu0 0.0
    %293 = vmatmul.mubr.f32.gmra.mrb[0].mxu0 %v226
    %v294 = vpop.f32.mrb[0].mxu0
    %v295 = vadd.f32 0.0, %v294
    %v296 = vpop.f32.mrb[0].mxu0
    %297 = vdwg.mxu0
    %v298 = vmul.f32 %v295, %v113
    %v299 = vsel %vm199, %v298, 0.0
    %300 = vadd.xlane.f32.xlu0 %v299
    %v301 = vpop.xlane.xlu0 %300
    %v302 = vsub.f32 0.0, %v301
    %v303 = vmin.f32 %v302, 0.0
    %v304 = vand.u32 2147483647, %v302
    %v305 = vsub.f32 0.0, %v304
    %v306 = vmul.f32 %v305, 1.442695
    %v307 = vpow.pop %v306
    %v308 = vadd.f32 %v307, 1.0
    %v309 = vlog2.pop %v308
    %v310 = vmul.f32 %v309, 0.6931472
    %v311 = vmul.f32 -0.5, %v307
    %v312 = vadd.f32 %v311, 1.0
    %v313 = vmul.f32 %v312, %v307
    %v314 = vand.u32 2147483647, %v307
    %vm315 = vcmp.lt.f32.partialorder %v314, 0.0004427343
    %v316 = vsel %vm315, %v313, %v310
    %v317 = vsub.f32 %v303, %v316
    %v318 = vadd.f32 %v218, %v317
    %319 = vset.pattern.permute.xlu0 3
    %320 = vperm.xlu0 %319, %v29
    %v321 = vpop.permute.xlu0 %320
    %vm322 = vcmp.eq.s32.totalorder %v31, %v321
    %v323 = vsel %vm322, 1, 0
    %v324 = vcvt.s32.f32 %v323
    %v326 = vsel %vm38, %v324, 0
    %328 = vmatprep.subr.mxu0 0.0
    %329 = vmatpush1.msra.mxu0 %v22
    %330 = vmatprep.subr.mxu0 0.0
    %331 = vmatpush1.msra.mxu0 %v23
    %332 = vmatprep.subr.mxu0 0.0
    %333 = vmatpush1.msra.mxu0 %v24
    %334 = vmatprep.subr.mxu0 0.0
    %335 = vmatpush1.msra.mxu0 %v25
    %336 = vmatprep.subr.mxu0 0.0
    %337 = vmatpush1.msra.mxu0 %v26
    %338 = vmatprep.subr.mxu0 0.0
    %339 = vmatpush1.msra.mxu0 %v27
    %340 = vmatprep.subr.mxu0 0.0
    %341 = vmatpush1.msra.mxu0 %v126
    %342 = vmatprep.subr.mxu0 0.0
    %343 = vmatpush1.msra.mxu0 0.0
    %344 = vmatprep.subr.mxu0 0.0
    %345 = vmatpush1.msra.mxu0 0.0
    %346 = vmatprep.subr.mxu0 0.0
    %347 = vmatpush1.msra.mxu0 0.0
    %348 = vmatprep.subr.mxu0 0.0
    %349 = vmatpush1.msra.mxu0 0.0
    %350 = vmatprep.subr.mxu0 0.0
    %351 = vmatpush1.msra.mxu0 0.0
    %352 = vmatprep.subr.mxu0 0.0
    %353 = vmatpush1.msra.mxu0 0.0
    %354 = vmatprep.subr.mxu0 0.0
    %355 = vmatpush1.msra.mxu0 0.0
    %356 = vmatprep.subr.mxu0 0.0
    %357 = vmatpush1.msra.mxu0 0.0
    %358 = vmatprep.subr.mxu0 0.0
    %359 = vmatpush1.msra.mxu0 0.0
    %360 = vmatprep.subr.mxu0 0.0
    %361 = vmatpush1.msra.mxu0 0.0
    %362 = vmatprep.subr.mxu0 0.0
    %363 = vmatpush1.msra.mxu0 0.0
    %364 = vmatprep.subr.mxu0 0.0
    %365 = vmatpush1.msra.mxu0 0.0
    %366 = vmatprep.subr.mxu0 0.0
    %367 = vmatpush1.msra.mxu0 0.0
    %368 = vmatprep.subr.mxu0 0.0
    %369 = vmatpush1.msra.mxu0 0.0
    %370 = vmatprep.subr.mxu0 0.0
    %371 = vmatpush1.msra.mxu0 0.0
    %372 = vmatprep.subr.mxu0 0.0
    %373 = vmatpush1.msra.mxu0 0.0
    %374 = vmatprep.subr.mxu0 0.0
    %375 = vmatpush1.msra.mxu0 0.0
    %376 = vmatprep.subr.mxu0 0.0
    %377 = vmatpush1.msra.mxu0 0.0
    %378 = vmatprep.subr.mxu0 0.0
    %379 = vmatpush1.msra.mxu0 0.0
    %380 = vmatprep.subr.mxu0 0.0
    %381 = vmatpush1.msra.mxu0 0.0
    %382 = vmatprep.subr.mxu0 0.0
    %383 = vmatpush1.msra.mxu0 0.0
    %384 = vmatprep.subr.mxu0 0.0
    %385 = vmatpush1.msra.mxu0 0.0
    %386 = vmatprep.subr.mxu0 0.0
    %387 = vmatpush1.msra.mxu0 0.0
    %388 = vmatprep.subr.mxu0 0.0
    %389 = vmatpush1.msra.mxu0 0.0
    %390 = vmatprep.subr.mxu0 0.0
    %391 = vmatpush1.msra.mxu0 0.0
    %392 = vmatprep.mubr.f32.mxu0 0.0
    %393 = vmatmul.mubr.f32.gmra.mrb[0].mxu0 %v326
    %v394 = vpop.f32.mrb[0].mxu0
    %v395 = vadd.f32 0.0, %v394
    %v396 = vpop.f32.mrb[0].mxu0
    %397 = vdwg.mxu0
    %v398 = vmul.f32 %v395, %v113
    %v399 = vsel %vm199, %v398, 0.0
    %400 = vadd.xlane.f32.xlu0 %v399
    %v401 = vpop.xlane.xlu0 %400
    %v402 = vsub.f32 0.0, %v401
    %v403 = vmin.f32 %v402, 0.0
    %v404 = vand.u32 2147483647, %v402
    %v405 = vsub.f32 0.0, %v404
    %v406 = vmul.f32 %v405, 1.442695
    %v407 = vpow.pop %v406
    %v408 = vadd.f32 %v407, 1.0
    %v409 = vlog2.pop %v408
    %v410 = vmul.f32 %v409, 0.6931472
    %v411 = vmul.f32 -0.5, %v407
    %v412 = vadd.f32 %v411, 1.0
    %v413 = vmul.f32 %v412, %v407
    %v414 = vand.u32 2147483647, %v407
    %vm415 = vcmp.lt.f32.partialorder %v414, 0.0004427343
    %v416 = vsel %vm415, %v413, %v410
    %v417 = vsub.f32 %v403, %v416
    %v418 = vadd.f32 %v318, %v417
    %419 = vset.pattern.permute.xlu0 4
    %420 = vperm.xlu0 %419, %v29
    %v421 = vpop.permute.xlu0 %420
    %vm422 = vcmp.eq.s32.totalorder %v31, %v421
    %v423 = vsel %vm422, 1, 0
    %v424 = vcvt.s32.f32 %v423
    %v426 = vsel %vm38, %v424, 0
    %428 = vmatprep.subr.mxu0 0.0
    %429 = vmatpush1.msra.mxu0 %v22
    %430 = vmatprep.subr.mxu0 0.0
    %431 = vmatpush1.msra.mxu0 %v23
    %432 = vmatprep.subr.mxu0 0.0
    %433 = vmatpush1.msra.mxu0 %v24
    %434 = vmatprep.subr.mxu0 0.0
    %435 = vmatpush1.msra.mxu0 %v25
    %436 = vmatprep.subr.mxu0 0.0
    %437 = vmatpush1.msra.mxu0 %v26
    %438 = vmatprep.subr.mxu0 0.0
    %439 = vmatpush1.msra.mxu0 %v27
    %440 = vmatprep.subr.mxu0 0.0
    %441 = vmatpush1.msra.mxu0 %v126
    %442 = vmatprep.subr.mxu0 0.0
    %443 = vmatpush1.msra.mxu0 0.0
    %444 = vmatprep.subr.mxu0 0.0
    %445 = vmatpush1.msra.mxu0 0.0
    %446 = vmatprep.subr.mxu0 0.0
    %447 = vmatpush1.msra.mxu0 0.0
    %448 = vmatprep.subr.mxu0 0.0
    %449 = vmatpush1.msra.mxu0 0.0
    %450 = vmatprep.subr.mxu0 0.0
    %451 = vmatpush1.msra.mxu0 0.0
    %452 = vmatprep.subr.mxu0 0.0
    %453 = vmatpush1.msra.mxu0 0.0
    %454 = vmatprep.subr.mxu0 0.0
    %455 = vmatpush1.msra.mxu0 0.0
    %456 = vmatprep.subr.mxu0 0.0
    %457 = vmatpush1.msra.mxu0 0.0
    %458 = vmatprep.subr.mxu0 0.0
    %459 = vmatpush1.msra.mxu0 0.0
    %460 = vmatprep.subr.mxu0 0.0
    %461 = vmatpush1.msra.mxu0 0.0
    %462 = vmatprep.subr.mxu0 0.0
    %463 = vmatpush1.msra.mxu0 0.0
    %464 = vmatprep.subr.mxu0 0.0
    %465 = vmatpush1.msra.mxu0 0.0
    %466 = vmatprep.subr.mxu0 0.0
    %467 = vmatpush1.msra.mxu0 0.0
    %468 = vmatprep.subr.mxu0 0.0
    %469 = vmatpush1.msra.mxu0 0.0
    %470 = vmatprep.subr.mxu0 0.0
    %471 = vmatpush1.msra.mxu0 0.0
    %472 = vmatprep.subr.mxu0 0.0
    %473 = vmatpush1.msra.mxu0 0.0
    %474 = vmatprep.subr.mxu0 0.0
    %475 = vmatpush1.msra.mxu0 0.0
    %476 = vmatprep.subr.mxu0 0.0
    %477 = vmatpush1.msra.mxu0 0.0
    %478 = vmatprep.subr.mxu0 0.0
    %479 = vmatpush1.msra.mxu0 0.0
    %480 = vmatprep.subr.mxu0 0.0
    %481 = vmatpush1.msra.mxu0 0.0
    %482 = vmatprep.subr.mxu0 0.0
    %483 = vmatpush1.msra.mxu0 0.0
    %484 = vmatprep.subr.mxu0 0.0
    %485 = vmatpush1.msra.mxu0 0.0
    %486 = vmatprep.subr.mxu0 0.0
    %487 = vmatpush1.msra.mxu0 0.0
    %488 = vmatprep.subr.mxu0 0.0
    %489 = vmatpush1.msra.mxu0 0.0
    %490 = vmatprep.subr.mxu0 0.0
    %491 = vmatpush1.msra.mxu0 0.0
    %492 = vmatprep.mubr.f32.mxu0 0.0
    %493 = vmatmul.mubr.f32.gmra.mrb[0].mxu0 %v426
    %v494 = vpop.f32.mrb[0].mxu0
    %v495 = vadd.f32 0.0, %v494
    %v496 = vpop.f32.mrb[0].mxu0
    %497 = vdwg.mxu0
    %v498 = vmul.f32 %v495, %v113
    %v499 = vsel %vm199, %v498, 0.0
    %500 = vadd.xlane.f32.xlu0 %v499
    %v501 = vpop.xlane.xlu0 %500
    %v502 = vsub.f32 0.0, %v501
    %v503 = vmin.f32 %v502, 0.0
    %v504 = vand.u32 2147483647, %v502
    %v505 = vsub.f32 0.0, %v504
    %v506 = vmul.f32 %v505, 1.442695
    %v507 = vpow.pop %v506
    %v508 = vadd.f32 %v507, 1.0
    %v509 = vlog2.pop %v508
    %v510 = vmul.f32 %v509, 0.6931472
    %v511 = vmul.f32 -0.5, %v507
    %v512 = vadd.f32 %v511, 1.0
    %v513 = vmul.f32 %v512, %v507
    %v514 = vand.u32 2147483647, %v507
    %vm515 = vcmp.lt.f32.partialorder %v514, 0.0004427343
    %v516 = vsel %vm515, %v513, %v510
    %v517 = vsub.f32 %v503, %v516
    %v518 = vadd.f32 %v418, %v517
    %519 = vset.pattern.permute.xlu0 5
    %520 = vperm.xlu0 %519, %v29
    %v521 = vpop.permute.xlu0 %520
    %vm522 = vcmp.eq.s32.totalorder %v31, %v521
    %v523 = vsel %vm522, 1, 0
    %v524 = vcvt.s32.f32 %v523
    %v526 = vsel %vm38, %v524, 0
    %528 = vmatprep.subr.mxu0 0.0
    %529 = vmatpush1.msra.mxu0 %v22
    %530 = vmatprep.subr.mxu0 0.0
    %531 = vmatpush1.msra.mxu0 %v23
    %532 = vmatprep.subr.mxu0 0.0
    %533 = vmatpush1.msra.mxu0 %v24
    %534 = vmatprep.subr.mxu0 0.0
    %535 = vmatpush1.msra.mxu0 %v25
    %536 = vmatprep.subr.mxu0 0.0
    %537 = vmatpush1.msra.mxu0 %v26
    %538 = vmatprep.subr.mxu0 0.0
    %539 = vmatpush1.msra.mxu0 %v27
    %540 = vmatprep.subr.mxu0 0.0
    %541 = vmatpush1.msra.mxu0 %v126
    %542 = vmatprep.subr.mxu0 0.0
    %543 = vmatpush1.msra.mxu0 0.0
    %544 = vmatprep.subr.mxu0 0.0
    %545 = vmatpush1.msra.mxu0 0.0
    %546 = vmatprep.subr.mxu0 0.0
    %547 = vmatpush1.msra.mxu0 0.0
    %548 = vmatprep.subr.mxu0 0.0
    %549 = vmatpush1.msra.mxu0 0.0
    %550 = vmatprep.subr.mxu0 0.0
    %551 = vmatpush1.msra.mxu0 0.0
    %552 = vmatprep.subr.mxu0 0.0
    %553 = vmatpush1.msra.mxu0 0.0
    %554 = vmatprep.subr.mxu0 0.0
    %555 = vmatpush1.msra.mxu0 0.0
    %556 = vmatprep.subr.mxu0 0.0
    %557 = vmatpush1.msra.mxu0 0.0
    %558 = vmatprep.subr.mxu0 0.0
    %559 = vmatpush1.msra.mxu0 0.0
    %560 = vmatprep.subr.mxu0 0.0
    %561 = vmatpush1.msra.mxu0 0.0
    %562 = vmatprep.subr.mxu0 0.0
    %563 = vmatpush1.msra.mxu0 0.0
    %564 = vmatprep.subr.mxu0 0.0
    %565 = vmatpush1.msra.mxu0 0.0
    %566 = vmatprep.subr.mxu0 0.0
    %567 = vmatpush1.msra.mxu0 0.0
    %568 = vmatprep.subr.mxu0 0.0
    %569 = vmatpush1.msra.mxu0 0.0
    %570 = vmatprep.subr.mxu0 0.0
    %571 = vmatpush1.msra.mxu0 0.0
    %572 = vmatprep.subr.mxu0 0.0
    %573 = vmatpush1.msra.mxu0 0.0
    %574 = vmatprep.subr.mxu0 0.0
    %575 = vmatpush1.msra.mxu0 0.0
    %576 = vmatprep.subr.mxu0 0.0
    %577 = vmatpush1.msra.mxu0 0.0
    %578 = vmatprep.subr.mxu0 0.0
    %579 = vmatpush1.msra.mxu0 0.0
    %580 = vmatprep.subr.mxu0 0.0
    %581 = vmatpush1.msra.mxu0 0.0
    %582 = vmatprep.subr.mxu0 0.0
    %583 = vmatpush1.msra.mxu0 0.0
    %584 = vmatprep.subr.mxu0 0.0
    %585 = vmatpush1.msra.mxu0 0.0
    %586 = vmatprep.subr.mxu0 0.0
    %587 = vmatpush1.msra.mxu0 0.0
    %588 = vmatprep.subr.mxu0 0.0
    %589 = vmatpush1.msra.mxu0 0.0
    %590 = vmatprep.subr.mxu0 0.0
    %591 = vmatpush1.msra.mxu0 0.0
    %592 = vmatprep.mubr.f32.mxu0 0.0
    %593 = vmatmul.mubr.f32.gmra.mrb[0].mxu0 %v526
    %v594 = vpop.f32.mrb[0].mxu0
    %v595 = vadd.f32 0.0, %v594
    %v596 = vpop.f32.mrb[0].mxu0
    %597 = vdwg.mxu0
    %v598 = vmul.f32 %v595, %v113
    %v599 = vsel %vm199, %v598, 0.0
    %600 = vadd.xlane.f32.xlu0 %v599
    %v601 = vpop.xlane.xlu0 %600
    %v602 = vsub.f32 0.0, %v601
    %v603 = vmin.f32 %v602, 0.0
    %v604 = vand.u32 2147483647, %v602
    %v605 = vsub.f32 0.0, %v604
    %v606 = vmul.f32 %v605, 1.442695
    %v607 = vpow.pop %v606
    %v608 = vadd.f32 %v607, 1.0
    %v609 = vlog2.pop %v608
    %v610 = vmul.f32 %v609, 0.6931472
    %v611 = vmul.f32 -0.5, %v607
    %v612 = vadd.f32 %v611, 1.0
    %v613 = vmul.f32 %v612, %v607
    %v614 = vand.u32 2147483647, %v607
    %vm615 = vcmp.lt.f32.partialorder %v614, 0.0004427343
    %v616 = vsel %vm615, %v613, %v610
    %v617 = vsub.f32 %v603, %v616
    %v618 = vadd.f32 %v518, %v617
    %619 = vset.pattern.permute.xlu0 6
    %620 = vperm.xlu0 %619, %v29
    %v621 = vpop.permute.xlu0 %620
    %vm622 = vcmp.eq.s32.totalorder %v31, %v621
    %v623 = vsel %vm622, 1, 0
    %v624 = vcvt.s32.f32 %v623
    %v626 = vsel %vm38, %v624, 0
    %628 = vmatprep.subr.mxu0 0.0
    %629 = vmatpush1.msra.mxu0 %v22
    %630 = vmatprep.subr.mxu0 0.0
    %631 = vmatpush1.msra.mxu0 %v23
    %632 = vmatprep.subr.mxu0 0.0
    %633 = vmatpush1.msra.mxu0 %v24
    %634 = vmatprep.subr.mxu0 0.0
    %635 = vmatpush1.msra.mxu0 %v25
    %636 = vmatprep.subr.mxu0 0.0
    %637 = vmatpush1.msra.mxu0 %v26
    %638 = vmatprep.subr.mxu0 0.0
    %639 = vmatpush1.msra.mxu0 %v27
    %640 = vmatprep.subr.mxu0 0.0
    %641 = vmatpush1.msra.mxu0 %v126
    %642 = vmatprep.subr.mxu0 0.0
    %643 = vmatpush1.msra.mxu0 0.0
    %644 = vmatprep.subr.mxu0 0.0
    %645 = vmatpush1.msra.mxu0 0.0
    %646 = vmatprep.subr.mxu0 0.0
    %647 = vmatpush1.msra.mxu0 0.0
    %648 = vmatprep.subr.mxu0 0.0
    %649 = vmatpush1.msra.mxu0 0.0
    %650 = vmatprep.subr.mxu0 0.0
    %651 = vmatpush1.msra.mxu0 0.0
    %652 = vmatprep.subr.mxu0 0.0
    %653 = vmatpush1.msra.mxu0 0.0
    %654 = vmatprep.subr.mxu0 0.0
    %655 = vmatpush1.msra.mxu0 0.0
    %656 = vmatprep.subr.mxu0 0.0
    %657 = vmatpush1.msra.mxu0 0.0
    %658 = vmatprep.subr.mxu0 0.0
    %659 = vmatpush1.msra.mxu0 0.0
    %660 = vmatprep.subr.mxu0 0.0
    %661 = vmatpush1.msra.mxu0 0.0
    %662 = vmatprep.subr.mxu0 0.0
    %663 = vmatpush1.msra.mxu0 0.0
    %664 = vmatprep.subr.mxu0 0.0
    %665 = vmatpush1.msra.mxu0 0.0
    %666 = vmatprep.subr.mxu0 0.0
    %667 = vmatpush1.msra.mxu0 0.0
    %668 = vmatprep.subr.mxu0 0.0
    %669 = vmatpush1.msra.mxu0 0.0
    %670 = vmatprep.subr.mxu0 0.0
    %671 = vmatpush1.msra.mxu0 0.0
    %672 = vmatprep.subr.mxu0 0.0
    %673 = vmatpush1.msra.mxu0 0.0
    %674 = vmatprep.subr.mxu0 0.0
    %675 = vmatpush1.msra.mxu0 0.0
    %676 = vmatprep.subr.mxu0 0.0
    %677 = vmatpush1.msra.mxu0 0.0
    %678 = vmatprep.subr.mxu0 0.0
    %679 = vmatpush1.msra.mxu0 0.0
    %680 = vmatprep.subr.mxu0 0.0
    %681 = vmatpush1.msra.mxu0 0.0
    %682 = vmatprep.subr.mxu0 0.0
    %683 = vmatpush1.msra.mxu0 0.0
    %684 = vmatprep.subr.mxu0 0.0
    %685 = vmatpush1.msra.mxu0 0.0
    %686 = vmatprep.subr.mxu0 0.0
    %687 = vmatpush1.msra.mxu0 0.0
    %688 = vmatprep.subr.mxu0 0.0
    %689 = vmatpush1.msra.mxu0 0.0
    %690 = vmatprep.subr.mxu0 0.0
    %691 = vmatpush1.msra.mxu0 0.0
    %692 = vmatprep.mubr.f32.mxu0 0.0
    %693 = vmatmul.mubr.f32.gmra.mrb[0].mxu0 %v626
    %v694 = vpop.f32.mrb[0].mxu0
    %v695 = vadd.f32 0.0, %v694
    %v696 = vpop.f32.mrb[0].mxu0
    %697 = vdwg.mxu0
    %v698 = vmul.f32 %v695, %v113
    %v699 = vsel %vm199, %v698, 0.0
    %700 = vadd.xlane.f32.xlu0 %v699
    %v701 = vpop.xlane.xlu0 %700
    %v702 = vsub.f32 0.0, %v701
    %v703 = vmin.f32 %v702, 0.0
    %v704 = vand.u32 2147483647, %v702
    %v705 = vsub.f32 0.0, %v704
    %v706 = vmul.f32 %v705, 1.442695
    %v707 = vpow.pop %v706
    %v708 = vadd.f32 %v707, 1.0
    %v709 = vlog2.pop %v708
    %v710 = vmul.f32 %v709, 0.6931472
    %v711 = vmul.f32 -0.5, %v707
    %v712 = vadd.f32 %v711, 1.0
    %v713 = vmul.f32 %v712, %v707
    %v714 = vand.u32 2147483647, %v707
    %vm715 = vcmp.lt.f32.partialorder %v714, 0.0004427343
    %v716 = vsel %vm715, %v713, %v710
    %v717 = vsub.f32 %v703, %v716
    %v718 = vadd.f32 %v618, %v717
    %s719 = smul.u32 0, 8
    %v720 = vlaneseq
    %v721 = vshrl.u32 %v720, 7
    %v722 = vstv %s719
    %v723 = vadd.s32 %v722, %v721
    %vm724 = vcmp.lt.s32.totalorder %v723, 8
    %v725 = vsel %vm724, %v718, 0.0
    %vm726 = vcmask 7168
    %v727 = vsel %vm726, %v725, 0.0
    %728 = vadd.xlane.f32.xlu0 %v727
    %v729 = vpop.xlane.xlu0 %728
    %v730 = vrot.slane %v729, 4
    %v731 = vadd.f32 %v729, %v730
    %v732 = vrot.slane %v731, 2
    %v733 = vadd.f32 %v731, %v732
    %v734 = vrot.slane %v733, 1
    %v735 = vadd.f32 %v733, %v734
    %s736 = vtos %v735
    %v737 = vstv %s736
    %738 = vst [vmem:[#allocation2] sm:$0xff] %v737
    // Predicated region
    $region14: #{tpu_custom_call.1} parent=1 // pred_check
      _
    $region15: #{tpu_custom_call.1} parent=1 // pred_check_branch
      %740 = sbr.rel (0) target = $region17
    $region16: #{tpu_custom_call.1} parent=1 // pred_region
      %s742 = ssub.s32 128, 128
      %743 = vsyncadd [#allocation3], %s742
      %s745 = sshll.u32 [#allocation2], 4
      %s746 = int_to_ptr.vmem [resolvable:$true] %s745
      %748 = dma.vmem_to_hbm [thread:$0]  %s746, 128, %s3, [#allocation3]
    $region17: #{tpu_custom_call.1} parent=1 // pred_fallthru
      _
    // Predicated region
    $region18: #{tpu_custom_call.1} parent=1 // pred_check
      _
    $region19: #{tpu_custom_call.1} parent=1 // pred_check_branch
      %750 = sbr.rel (0) target = $region21
    $region20: #{tpu_custom_call.1} parent=1 // pred_region
      %751 = dma.done [#allocation3], 128
    $region21: #{tpu_custom_call.1} parent=1 // pred_fallthru
      _
    %752 = vsyncpa [#allocation3], 1

// kernel: tpu_custom_call.1
$region0: #{tpu_custom_call.1}
  #allocation0 [shape = 'u32[]', space=smem, size = 0x4, offset = 0x4, fixed_abs, tag = 'smem constant byte address 0x4 - core index']
  #allocation1 [shape = 'u32[144,128]{1,0:T(1,128)}', space=vmem, size = 0x12000, scoped, tag = 'internal scratch']
  %s0 = inlined_call_operand.vmem [shape: f32[50,32], index: 0, kind: input, shape index: {}]
  %s1 = inlined_call_operand.vmem [shape: f32[50,32], index: 1, kind: input, shape index: {}]
  %s2 = inlined_call_operand.vmem [shape: s32[8,7], index: 2, kind: input, shape index: {}]
  %s3 = inlined_call_operand.hbm [shape: f32[1,8,128], index: 3, kind: output, shape index: {}]
  %s4 = sld [smem:[#allocation0]]
  $region22: #{tpu_custom_call.1} parent=0
    _
  %s6 = ssub.s32 1, %s4
  %s7 = scalar_select 0, %s6, %s4
  $region1: #{tpu_custom_call.1} parent=0
    #allocation2 [shape = 'u8[4096]{0}', space=vmem, size = 0x1000, scoped, tag = 'output window, operand 0, single buffered']
    #allocation3 [shape = 's32[1]{0}', space=sflag, size = 0x4, scoped, tag = 'scoped memory for tpu_custom_call.1']
    %8 = vsyncpa [#allocation3], 0
    // Predicated region
    $region2: #{tpu_custom_call.1} parent=1 // pred_check
      _
    $region3: #{tpu_custom_call.1} parent=1 // pred_check_branch
      %10 = sbr.rel (0) target = $region5
    $region4: #{tpu_custom_call.1} parent=1 // pred_region
      _
    $region5: #{tpu_custom_call.1} parent=1 // pred_fallthru
      _
    // Predicated region
    $region6: #{tpu_custom_call.1} parent=1 // pred_check
      _
    $region7: #{tpu_custom_call.1} parent=1 // pred_check_branch
      %12 = sbr.rel (0) target = $region9
    $region8: #{tpu_custom_call.1} parent=1 // pred_region
      _
    $region9: #{tpu_custom_call.1} parent=1 // pred_fallthru
      _
    // Predicated region
    $region10: #{tpu_custom_call.1} parent=1 // pred_check
      _
    $region11: #{tpu_custom_call.1} parent=1 // pred_check_branch
      %14 = sbr.rel (0) target = $region13
    $region12: #{tpu_custom_call.1} parent=1 // pred_region
      _
    $region13: #{tpu_custom_call.1} parent=1 // pred_fallthru
      _
    %v15 = vld [vmem:[%s0] sm:$0xff]
    %v16 = vld [vmem:[%s0 + $0x8] sm:$0xff]
    %v17 = vld [vmem:[%s0 + $0x10] sm:$0xff]
    %v18 = vld [vmem:[%s0 + $0x18] sm:$0xff]
    %v19 = vld [vmem:[%s0 + $0x20] sm:$0xff]
    %v20 = vld [vmem:[%s0 + $0x28] sm:$0xff]
    %v21 = vld [vmem:[%s0 + $0x30] sm:$0x3]
    %v22 = vld [vmem:[%s1] sm:$0xff]
    %v23 = vld [vmem:[%s1 + $0x8] sm:$0xff]
    %v24 = vld [vmem:[%s1 + $0x10] sm:$0xff]
    %v25 = vld [vmem:[%s1 + $0x18] sm:$0xff]
    %v26 = vld [vmem:[%s1 + $0x20] sm:$0xff]
    %v27 = vld [vmem:[%s1 + $0x28] sm:$0xff]
    %v28 = vld [vmem:[%s1 + $0x30] sm:$0x3]
    %v29 = vld [vmem:[%s2] sm:$0xff]
    %v30 = vlaneseq
    %v31 = vand.u32 %v30, 127
    %32 = vset.pattern.permute.xlu0 0
    %33 = vperm.xlu0 %32, %v29
    %v34 = vpop.permute.xlu0 %33
    %vm35 = vcmp.eq.s32.totalorder %v31, %v34
    %v36 = vsel %vm35, 1, 0
    %v37 = vcvt.s32.f32 %v36
    %vm38 = vcmask 408576
    %v40 = vsel %vm38, %v37, 0
    %vm42 = vcmask 1041408
    %v44 = vsel %vm42, %v21, 0
    %46 = vmatprep.subr.mxu0 0.0
    %47 = vmatpush1.msra.mxu0 %v15
    %48 = vmatprep.subr.mxu0 0.0
    %49 = vmatpush1.msra.mxu0 %v16
    %50 = vmatprep.subr.mxu0 0.0
    %51 = vmatpush1.msra.mxu0 %v17
    %52 = vmatprep.subr.mxu0 0.0
    %53 = vmatpush1.msra.mxu0 %v18
    %54 = vmatprep.subr.mxu0 0.0
    %55 = vmatpush1.msra.mxu0 %v19
    %56 = vmatprep.subr.mxu0 0.0
    %57 = vmatpush1.msra.mxu0 %v20
    %58 = vmatprep.subr.mxu0 0.0
    %59 = vmatpush1.msra.mxu0 %v44
    %60 = vmatprep.subr.mxu0 0.0
    %61 = vmatpush1.msra.mxu0 0.0
    %62 = vmatprep.subr.mxu0 0.0
    %63 = vmatpush1.msra.mxu0 0.0
    %64 = vmatprep.subr.mxu0 0.0
    %65 = vmatpush1.msra.mxu0 0.0
    %66 = vmatprep.subr.mxu0 0.0
    %67 = vmatpush1.msra.mxu0 0.0
    %68 = vmatprep.subr.mxu0 0.0
    %69 = vmatpush1.msra.mxu0 0.0
    %70 = vmatprep.subr.mxu0 0.0
    %71 = vmatpush1.msra.mxu0 0.0
    %72 = vmatprep.subr.mxu0 0.0
    %73 = vmatpush1.msra.mxu0 0.0
    %74 = vmatprep.subr.mxu0 0.0
    %75 = vmatpush1.msra.mxu0 0.0
    %76 = vmatprep.subr.mxu0 0.0
    %77 = vmatpush1.msra.mxu0 0.0
    %78 = vmatprep.subr.mxu0 0.0
    %79 = vmatpush1.msra.mxu0 0.0
    %80 = vmatprep.subr.mxu0 0.0
    %81 = vmatpush1.msra.mxu0 0.0
    %82 = vmatprep.subr.mxu0 0.0
    %83 = vmatpush1.msra.mxu0 0.0
    %84 = vmatprep.subr.mxu0 0.0
    %85 = vmatpush1.msra.mxu0 0.0
    %86 = vmatprep.subr.mxu0 0.0
    %87 = vmatpush1.msra.mxu0 0.0
    %88 = vmatprep.subr.mxu0 0.0
    %89 = vmatpush1.msra.mxu0 0.0
    %90 = vmatprep.subr.mxu0 0.0
    %91 = vmatpush1.msra.mxu0 0.0
    %92 = vmatprep.subr.mxu0 0.0
    %93 = vmatpush1.msra.mxu0 0.0
    %94 = vmatprep.subr.mxu0 0.0
    %95 = vmatpush1.msra.mxu0 0.0
    %96 = vmatprep.subr.mxu0 0.0
    %97 = vmatpush1.msra.mxu0 0.0
    %98 = vmatprep.subr.mxu0 0.0
    %99 = vmatpush1.msra.mxu0 0.0
    %100 = vmatprep.subr.mxu0 0.0
    %101 = vmatpush1.msra.mxu0 0.0
    %102 = vmatprep.subr.mxu0 0.0
    %103 = vmatpush1.msra.mxu0 0.0
    %104 = vmatprep.subr.mxu0 0.0
    %105 = vmatpush1.msra.mxu0 0.0
    %106 = vmatprep.subr.mxu0 0.0
    %107 = vmatpush1.msra.mxu0 0.0
    %108 = vmatprep.subr.mxu0 0.0
    %109 = vmatpush1.msra.mxu0 0.0
    %110 = vmatprep.mubr.f32.mxu0 0.0
    %111 = vmatmul.mubr.f32.gmra.mrb[0].mxu0 %v40
    %v112 = vpop.f32.mrb[0].mxu0
    %v113 = vadd.f32 0.0, %v112
    %v114 = vpop.f32.mrb[0].mxu0
    %115 = vdwg.mxu0
    %116 = vset.pattern.permute.xlu0 1
    %117 = vperm.xlu0 %116, %v29
    %v118 = vpop.permute.xlu0 %117
    %vm119 = vcmp.eq.s32.totalorder %v31, %v118
    %v120 = vsel %vm119, 1, 0
    %v121 = vcvt.s32.f32 %v120
    %v123 = vsel %vm38, %v121, 0
    %v126 = vsel %vm42, %v28, 0
    %128 = vmatprep.subr.mxu0 0.0
    %129 = vmatpush1.msra.mxu0 %v22
    %130 = vmatprep.subr.mxu0 0.0
    %131 = vmatpush1.msra.mxu0 %v23
    %132 = vmatprep.subr.mxu0 0.0
    %133 = vmatpush1.msra.mxu0 %v24
    %134 = vmatprep.subr.mxu0 0.0
    %135 = vmatpush1.msra.mxu0 %v25
    %136 = vmatprep.subr.mxu0 0.0
    %137 = vmatpush1.msra.mxu0 %v26
    %138 = vmatprep.subr.mxu0 0.0
    %139 = vmatpush1.msra.mxu0 %v27
    %140 = vmatprep.subr.mxu0 0.0
    %141 = vmatpush1.msra.mxu0 %v126
    %142 = vmatprep.subr.mxu0 0.0
    %143 = vmatpush1.msra.mxu0 0.0
    %144 = vmatprep.subr.mxu0 0.0
    %145 = vmatpush1.msra.mxu0 0.0
    %146 = vmatprep.subr.mxu0 0.0
    %147 = vmatpush1.msra.mxu0 0.0
    %148 = vmatprep.subr.mxu0 0.0
    %149 = vmatpush1.msra.mxu0 0.0
    %150 = vmatprep.subr.mxu0 0.0
    %151 = vmatpush1.msra.mxu0 0.0
    %152 = vmatprep.subr.mxu0 0.0
    %153 = vmatpush1.msra.mxu0 0.0
    %154 = vmatprep.subr.mxu0 0.0
    %155 = vmatpush1.msra.mxu0 0.0
    %156 = vmatprep.subr.mxu0 0.0
    %157 = vmatpush1.msra.mxu0 0.0
    %158 = vmatprep.subr.mxu0 0.0
    %159 = vmatpush1.msra.mxu0 0.0
    %160 = vmatprep.subr.mxu0 0.0
    %161 = vmatpush1.msra.mxu0 0.0
    %162 = vmatprep.subr.mxu0 0.0
    %163 = vmatpush1.msra.mxu0 0.0
    %164 = vmatprep.subr.mxu0 0.0
    %165 = vmatpush1.msra.mxu0 0.0
    %166 = vmatprep.subr.mxu0 0.0
    %167 = vmatpush1.msra.mxu0 0.0
    %168 = vmatprep.subr.mxu0 0.0
    %169 = vmatpush1.msra.mxu0 0.0
    %170 = vmatprep.subr.mxu0 0.0
    %171 = vmatpush1.msra.mxu0 0.0
    %172 = vmatprep.subr.mxu0 0.0
    %173 = vmatpush1.msra.mxu0 0.0
    %174 = vmatprep.subr.mxu0 0.0
    %175 = vmatpush1.msra.mxu0 0.0
    %176 = vmatprep.subr.mxu0 0.0
    %177 = vmatpush1.msra.mxu0 0.0
    %178 = vmatprep.subr.mxu0 0.0
    %179 = vmatpush1.msra.mxu0 0.0
    %180 = vmatprep.subr.mxu0 0.0
    %181 = vmatpush1.msra.mxu0 0.0
    %182 = vmatprep.subr.mxu0 0.0
    %183 = vmatpush1.msra.mxu0 0.0
    %184 = vmatprep.subr.mxu0 0.0
    %185 = vmatpush1.msra.mxu0 0.0
    %186 = vmatprep.subr.mxu0 0.0
    %187 = vmatpush1.msra.mxu0 0.0
    %188 = vmatprep.subr.mxu0 0.0
    %189 = vmatpush1.msra.mxu0 0.0
    %190 = vmatprep.subr.mxu0 0.0
    %191 = vmatpush1.msra.mxu0 0.0
    %192 = vmatprep.mubr.f32.mxu0 0.0
    %193 = vmatmul.mubr.f32.gmra.mrb[0].mxu0 %v123
    %v194 = vpop.f32.mrb[0].mxu0
    %v195 = vadd.f32 0.0, %v194
    %v196 = vpop.f32.mrb[0].mxu0
    %197 = vdwg.mxu0
    %v198 = vmul.f32 %v195, %v113
    %vm199 = vcmask 261120
    %v200 = vsel %vm199, %v198, 0.0
    %201 = vadd.xlane.f32.xlu0 %v200
    %v202 = vpop.xlane.xlu0 %201
    %v203 = vmin.f32 %v202, 0.0
    %v204 = vand.u32 2147483647, %v202
    %v205 = vsub.f32 0.0, %v204
    %v206 = vmul.f32 %v205, 1.442695
    %v207 = vpow.pop %v206
    %v208 = vadd.f32 %v207, 1.0
    %v209 = vlog2.pop %v208
    %v210 = vmul.f32 %v209, 0.6931472
    %v211 = vmul.f32 -0.5, %v207
    %v212 = vadd.f32 %v211, 1.0
    %v213 = vmul.f32 %v212, %v207
    %v214 = vand.u32 2147483647, %v207
    %vm215 = vcmp.lt.f32.partialorder %v214, 0.0004427343
    %v216 = vsel %vm215, %v213, %v210
    %v217 = vsub.f32 %v203, %v216
    %v218 = vadd.f32 %v217, 0.0
    %219 = vset.pattern.permute.xlu0 2
    %220 = vperm.xlu0 %219, %v29
    %v221 = vpop.permute.xlu0 %220
    %vm222 = vcmp.eq.s32.totalorder %v31, %v221
    %v223 = vsel %vm222, 1, 0
    %v224 = vcvt.s32.f32 %v223
    %v226 = vsel %vm38, %v224, 0
    %228 = vmatprep.subr.mxu0 0.0
    %229 = vmatpush1.msra.mxu0 %v22
    %230 = vmatprep.subr.mxu0 0.0
    %231 = vmatpush1.msra.mxu0 %v23
    %232 = vmatprep.subr.mxu0 0.0
    %233 = vmatpush1.msra.mxu0 %v24
    %234 = vmatprep.subr.mxu0 0.0
    %235 = vmatpush1.msra.mxu0 %v25
    %236 = vmatprep.subr.mxu0 0.0
    %237 = vmatpush1.msra.mxu0 %v26
    %238 = vmatprep.subr.mxu0 0.0
    %239 = vmatpush1.msra.mxu0 %v27
    %240 = vmatprep.subr.mxu0 0.0
    %241 = vmatpush1.msra.mxu0 %v126
    %242 = vmatprep.subr.mxu0 0.0
    %243 = vmatpush1.msra.mxu0 0.0
    %244 = vmatprep.subr.mxu0 0.0
    %245 = vmatpush1.msra.mxu0 0.0
    %246 = vmatprep.subr.mxu0 0.0
    %247 = vmatpush1.msra.mxu0 0.0
    %248 = vmatprep.subr.mxu0 0.0
    %249 = vmatpush1.msra.mxu0 0.0
    %250 = vmatprep.subr.mxu0 0.0
    %251 = vmatpush1.msra.mxu0 0.0
    %252 = vmatprep.subr.mxu0 0.0
    %253 = vmatpush1.msra.mxu0 0.0
    %254 = vmatprep.subr.mxu0 0.0
    %255 = vmatpush1.msra.mxu0 0.0
    %256 = vmatprep.subr.mxu0 0.0
    %257 = vmatpush1.msra.mxu0 0.0
    %258 = vmatprep.subr.mxu0 0.0
    %259 = vmatpush1.msra.mxu0 0.0
    %260 = vmatprep.subr.mxu0 0.0
    %261 = vmatpush1.msra.mxu0 0.0
    %262 = vmatprep.subr.mxu0 0.0
    %263 = vmatpush1.msra.mxu0 0.0
    %264 = vmatprep.subr.mxu0 0.0
    %265 = vmatpush1.msra.mxu0 0.0
    %266 = vmatprep.subr.mxu0 0.0
    %267 = vmatpush1.msra.mxu0 0.0
    %268 = vmatprep.subr.mxu0 0.0
    %269 = vmatpush1.msra.mxu0 0.0
    %270 = vmatprep.subr.mxu0 0.0
    %271 = vmatpush1.msra.mxu0 0.0
    %272 = vmatprep.subr.mxu0 0.0
    %273 = vmatpush1.msra.mxu0 0.0
    %274 = vmatprep.subr.mxu0 0.0
    %275 = vmatpush1.msra.mxu0 0.0
    %276 = vmatprep.subr.mxu0 0.0
    %277 = vmatpush1.msra.mxu0 0.0
    %278 = vmatprep.subr.mxu0 0.0
    %279 = vmatpush1.msra.mxu0 0.0
    %280 = vmatprep.subr.mxu0 0.0
    %281 = vmatpush1.msra.mxu0 0.0
    %282 = vmatprep.subr.mxu0 0.0
    %283 = vmatpush1.msra.mxu0 0.0
    %284 = vmatprep.subr.mxu0 0.0
    %285 = vmatpush1.msra.mxu0 0.0
    %286 = vmatprep.subr.mxu0 0.0
    %287 = vmatpush1.msra.mxu0 0.0
    %288 = vmatprep.subr.mxu0 0.0
    %289 = vmatpush1.msra.mxu0 0.0
    %290 = vmatprep.subr.mxu0 0.0
    %291 = vmatpush1.msra.mxu0 0.0
    %292 = vmatprep.mubr.f32.mxu0 0.0
    %293 = vmatmul.mubr.f32.gmra.mrb[0].mxu0 %v226
    %v294 = vpop.f32.mrb[0].mxu0
    %v295 = vadd.f32 0.0, %v294
    %v296 = vpop.f32.mrb[0].mxu0
    %297 = vdwg.mxu0
    %v298 = vmul.f32 %v295, %v113
    %v299 = vsel %vm199, %v298, 0.0
    %300 = vadd.xlane.f32.xlu0 %v299
    %v301 = vpop.xlane.xlu0 %300
    %v302 = vsub.f32 0.0, %v301
    %v303 = vmin.f32 %v302, 0.0
    %v304 = vand.u32 2147483647, %v302
    %v305 = vsub.f32 0.0, %v304
    %v306 = vmul.f32 %v305, 1.442695
    %v307 = vpow.pop %v306
    %v308 = vadd.f32 %v307, 1.0
    %v309 = vlog2.pop %v308
    %v310 = vmul.f32 %v309, 0.6931472
    %v311 = vmul.f32 -0.5, %v307
    %v312 = vadd.f32 %v311, 1.0
    %v313 = vmul.f32 %v312, %v307
    %v314 = vand.u32 2147483647, %v307
    %vm315 = vcmp.lt.f32.partialorder %v314, 0.0004427343
    %v316 = vsel %vm315, %v313, %v310
    %v317 = vsub.f32 %v303, %v316
    %v318 = vadd.f32 %v218, %v317
    %319 = vset.pattern.permute.xlu0 3
    %320 = vperm.xlu0 %319, %v29
    %v321 = vpop.permute.xlu0 %320
    %vm322 = vcmp.eq.s32.totalorder %v31, %v321
    %v323 = vsel %vm322, 1, 0
    %v324 = vcvt.s32.f32 %v323
    %v326 = vsel %vm38, %v324, 0
    %328 = vmatprep.subr.mxu0 0.0
    %329 = vmatpush1.msra.mxu0 %v22
    %330 = vmatprep.subr.mxu0 0.0
    %331 = vmatpush1.msra.mxu0 %v23
    %332 = vmatprep.subr.mxu0 0.0
    %333 = vmatpush1.msra.mxu0 %v24
    %334 = vmatprep.subr.mxu0 0.0
    %335 = vmatpush1.msra.mxu0 %v25
    %336 = vmatprep.subr.mxu0 0.0
    %337 = vmatpush1.msra.mxu0 %v26
    %338 = vmatprep.subr.mxu0 0.0
    %339 = vmatpush1.msra.mxu0 %v27
    %340 = vmatprep.subr.mxu0 0.0
    %341 = vmatpush1.msra.mxu0 %v126
    %342 = vmatprep.subr.mxu0 0.0
    %343 = vmatpush1.msra.mxu0 0.0
    %344 = vmatprep.subr.mxu0 0.0
    %345 = vmatpush1.msra.mxu0 0.0
    %346 = vmatprep.subr.mxu0 0.0
    %347 = vmatpush1.msra.mxu0 0.0
    %348 = vmatprep.subr.mxu0 0.0
    %349 = vmatpush1.msra.mxu0 0.0
    %350 = vmatprep.subr.mxu0 0.0
    %351 = vmatpush1.msra.mxu0 0.0
    %352 = vmatprep.subr.mxu0 0.0
    %353 = vmatpush1.msra.mxu0 0.0
    %354 = vmatprep.subr.mxu0 0.0
    %355 = vmatpush1.msra.mxu0 0.0
    %356 = vmatprep.subr.mxu0 0.0
    %357 = vmatpush1.msra.mxu0 0.0
    %358 = vmatprep.subr.mxu0 0.0
    %359 = vmatpush1.msra.mxu0 0.0
    %360 = vmatprep.subr.mxu0 0.0
    %361 = vmatpush1.msra.mxu0 0.0
    %362 = vmatprep.subr.mxu0 0.0
    %363 = vmatpush1.msra.mxu0 0.0
    %364 = vmatprep.subr.mxu0 0.0
    %365 = vmatpush1.msra.mxu0 0.0
    %366 = vmatprep.subr.mxu0 0.0
    %367 = vmatpush1.msra.mxu0 0.0
    %368 = vmatprep.subr.mxu0 0.0
    %369 = vmatpush1.msra.mxu0 0.0
    %370 = vmatprep.subr.mxu0 0.0
    %371 = vmatpush1.msra.mxu0 0.0
    %372 = vmatprep.subr.mxu0 0.0
    %373 = vmatpush1.msra.mxu0 0.0
    %374 = vmatprep.subr.mxu0 0.0
    %375 = vmatpush1.msra.mxu0 0.0
    %376 = vmatprep.subr.mxu0 0.0
    %377 = vmatpush1.msra.mxu0 0.0
    %378 = vmatprep.subr.mxu0 0.0
    %379 = vmatpush1.msra.mxu0 0.0
    %380 = vmatprep.subr.mxu0 0.0
    %381 = vmatpush1.msra.mxu0 0.0
    %382 = vmatprep.subr.mxu0 0.0
    %383 = vmatpush1.msra.mxu0 0.0
    %384 = vmatprep.subr.mxu0 0.0
    %385 = vmatpush1.msra.mxu0 0.0
    %386 = vmatprep.subr.mxu0 0.0
    %387 = vmatpush1.msra.mxu0 0.0
    %388 = vmatprep.subr.mxu0 0.0
    %389 = vmatpush1.msra.mxu0 0.0
    %390 = vmatprep.subr.mxu0 0.0
    %391 = vmatpush1.msra.mxu0 0.0
    %392 = vmatprep.mubr.f32.mxu0 0.0
    %393 = vmatmul.mubr.f32.gmra.mrb[0].mxu0 %v326
    %v394 = vpop.f32.mrb[0].mxu0
    %v395 = vadd.f32 0.0, %v394
    %v396 = vpop.f32.mrb[0].mxu0
    %397 = vdwg.mxu0
    %v398 = vmul.f32 %v395, %v113
    %v399 = vsel %vm199, %v398, 0.0
    %400 = vadd.xlane.f32.xlu0 %v399
    %v401 = vpop.xlane.xlu0 %400
    %v402 = vsub.f32 0.0, %v401
    %v403 = vmin.f32 %v402, 0.0
    %v404 = vand.u32 2147483647, %v402
    %v405 = vsub.f32 0.0, %v404
    %v406 = vmul.f32 %v405, 1.442695
    %v407 = vpow.pop %v406
    %v408 = vadd.f32 %v407, 1.0
    %v409 = vlog2.pop %v408
    %v410 = vmul.f32 %v409, 0.6931472
    %v411 = vmul.f32 -0.5, %v407
    %v412 = vadd.f32 %v411, 1.0
    %v413 = vmul.f32 %v412, %v407
    %v414 = vand.u32 2147483647, %v407
    %vm415 = vcmp.lt.f32.partialorder %v414, 0.0004427343
    %v416 = vsel %vm415, %v413, %v410
    %v417 = vsub.f32 %v403, %v416
    %v418 = vadd.f32 %v318, %v417
    %419 = vset.pattern.permute.xlu0 4
    %420 = vperm.xlu0 %419, %v29
    %v421 = vpop.permute.xlu0 %420
    %vm422 = vcmp.eq.s32.totalorder %v31, %v421
    %v423 = vsel %vm422, 1, 0
    %v424 = vcvt.s32.f32 %v423
    %v426 = vsel %vm38, %v424, 0
    %428 = vmatprep.subr.mxu0 0.0
    %429 = vmatpush1.msra.mxu0 %v22
    %430 = vmatprep.subr.mxu0 0.0
    %431 = vmatpush1.msra.mxu0 %v23
    %432 = vmatprep.subr.mxu0 0.0
    %433 = vmatpush1.msra.mxu0 %v24
    %434 = vmatprep.subr.mxu0 0.0
    %435 = vmatpush1.msra.mxu0 %v25
    %436 = vmatprep.subr.mxu0 0.0
    %437 = vmatpush1.msra.mxu0 %v26
    %438 = vmatprep.subr.mxu0 0.0
    %439 = vmatpush1.msra.mxu0 %v27
    %440 = vmatprep.subr.mxu0 0.0
    %441 = vmatpush1.msra.mxu0 %v126
    %442 = vmatprep.subr.mxu0 0.0
    %443 = vmatpush1.msra.mxu0 0.0
    %444 = vmatprep.subr.mxu0 0.0
    %445 = vmatpush1.msra.mxu0 0.0
    %446 = vmatprep.subr.mxu0 0.0
    %447 = vmatpush1.msra.mxu0 0.0
    %448 = vmatprep.subr.mxu0 0.0
    %449 = vmatpush1.msra.mxu0 0.0
    %450 = vmatprep.subr.mxu0 0.0
    %451 = vmatpush1.msra.mxu0 0.0
    %452 = vmatprep.subr.mxu0 0.0
    %453 = vmatpush1.msra.mxu0 0.0
    %454 = vmatprep.subr.mxu0 0.0
    %455 = vmatpush1.msra.mxu0 0.0
    %456 = vmatprep.subr.mxu0 0.0
    %457 = vmatpush1.msra.mxu0 0.0
    %458 = vmatprep.subr.mxu0 0.0
    %459 = vmatpush1.msra.mxu0 0.0
    %460 = vmatprep.subr.mxu0 0.0
    %461 = vmatpush1.msra.mxu0 0.0
    %462 = vmatprep.subr.mxu0 0.0
    %463 = vmatpush1.msra.mxu0 0.0
    %464 = vmatprep.subr.mxu0 0.0
    %465 = vmatpush1.msra.mxu0 0.0
    %466 = vmatprep.subr.mxu0 0.0
    %467 = vmatpush1.msra.mxu0 0.0
    %468 = vmatprep.subr.mxu0 0.0
    %469 = vmatpush1.msra.mxu0 0.0
    %470 = vmatprep.subr.mxu0 0.0
    %471 = vmatpush1.msra.mxu0 0.0
    %472 = vmatprep.subr.mxu0 0.0
    %473 = vmatpush1.msra.mxu0 0.0
    %474 = vmatprep.subr.mxu0 0.0
    %475 = vmatpush1.msra.mxu0 0.0
    %476 = vmatprep.subr.mxu0 0.0
    %477 = vmatpush1.msra.mxu0 0.0
    %478 = vmatprep.subr.mxu0 0.0
    %479 = vmatpush1.msra.mxu0 0.0
    %480 = vmatprep.subr.mxu0 0.0
    %481 = vmatpush1.msra.mxu0 0.0
    %482 = vmatprep.subr.mxu0 0.0
    %483 = vmatpush1.msra.mxu0 0.0
    %484 = vmatprep.subr.mxu0 0.0
    %485 = vmatpush1.msra.mxu0 0.0
    %486 = vmatprep.subr.mxu0 0.0
    %487 = vmatpush1.msra.mxu0 0.0
    %488 = vmatprep.subr.mxu0 0.0
    %489 = vmatpush1.msra.mxu0 0.0
    %490 = vmatprep.subr.mxu0 0.0
    %491 = vmatpush1.msra.mxu0 0.0
    %492 = vmatprep.mubr.f32.mxu0 0.0
    %493 = vmatmul.mubr.f32.gmra.mrb[0].mxu0 %v426
    %v494 = vpop.f32.mrb[0].mxu0
    %v495 = vadd.f32 0.0, %v494
    %v496 = vpop.f32.mrb[0].mxu0
    %497 = vdwg.mxu0
    %v498 = vmul.f32 %v495, %v113
    %v499 = vsel %vm199, %v498, 0.0
    %500 = vadd.xlane.f32.xlu0 %v499
    %v501 = vpop.xlane.xlu0 %500
    %v502 = vsub.f32 0.0, %v501
    %v503 = vmin.f32 %v502, 0.0
    %v504 = vand.u32 2147483647, %v502
    %v505 = vsub.f32 0.0, %v504
    %v506 = vmul.f32 %v505, 1.442695
    %v507 = vpow.pop %v506
    %v508 = vadd.f32 %v507, 1.0
    %v509 = vlog2.pop %v508
    %v510 = vmul.f32 %v509, 0.6931472
    %v511 = vmul.f32 -0.5, %v507
    %v512 = vadd.f32 %v511, 1.0
    %v513 = vmul.f32 %v512, %v507
    %v514 = vand.u32 2147483647, %v507
    %vm515 = vcmp.lt.f32.partialorder %v514, 0.0004427343
    %v516 = vsel %vm515, %v513, %v510
    %v517 = vsub.f32 %v503, %v516
    %v518 = vadd.f32 %v418, %v517
    %519 = vset.pattern.permute.xlu0 5
    %520 = vperm.xlu0 %519, %v29
    %v521 = vpop.permute.xlu0 %520
    %vm522 = vcmp.eq.s32.totalorder %v31, %v521
    %v523 = vsel %vm522, 1, 0
    %v524 = vcvt.s32.f32 %v523
    %v526 = vsel %vm38, %v524, 0
    %528 = vmatprep.subr.mxu0 0.0
    %529 = vmatpush1.msra.mxu0 %v22
    %530 = vmatprep.subr.mxu0 0.0
    %531 = vmatpush1.msra.mxu0 %v23
    %532 = vmatprep.subr.mxu0 0.0
    %533 = vmatpush1.msra.mxu0 %v24
    %534 = vmatprep.subr.mxu0 0.0
    %535 = vmatpush1.msra.mxu0 %v25
    %536 = vmatprep.subr.mxu0 0.0
    %537 = vmatpush1.msra.mxu0 %v26
    %538 = vmatprep.subr.mxu0 0.0
    %539 = vmatpush1.msra.mxu0 %v27
    %540 = vmatprep.subr.mxu0 0.0
    %541 = vmatpush1.msra.mxu0 %v126
    %542 = vmatprep.subr.mxu0 0.0
    %543 = vmatpush1.msra.mxu0 0.0
    %544 = vmatprep.subr.mxu0 0.0
    %545 = vmatpush1.msra.mxu0 0.0
    %546 = vmatprep.subr.mxu0 0.0
    %547 = vmatpush1.msra.mxu0 0.0
    %548 = vmatprep.subr.mxu0 0.0
    %549 = vmatpush1.msra.mxu0 0.0
    %550 = vmatprep.subr.mxu0 0.0
    %551 = vmatpush1.msra.mxu0 0.0
    %552 = vmatprep.subr.mxu0 0.0
    %553 = vmatpush1.msra.mxu0 0.0
    %554 = vmatprep.subr.mxu0 0.0
    %555 = vmatpush1.msra.mxu0 0.0
    %556 = vmatprep.subr.mxu0 0.0
    %557 = vmatpush1.msra.mxu0 0.0
    %558 = vmatprep.subr.mxu0 0.0
    %559 = vmatpush1.msra.mxu0 0.0
    %560 = vmatprep.subr.mxu0 0.0
    %561 = vmatpush1.msra.mxu0 0.0
    %562 = vmatprep.subr.mxu0 0.0
    %563 = vmatpush1.msra.mxu0 0.0
    %564 = vmatprep.subr.mxu0 0.0
    %565 = vmatpush1.msra.mxu0 0.0
    %566 = vmatprep.subr.mxu0 0.0
    %567 = vmatpush1.msra.mxu0 0.0
    %568 = vmatprep.subr.mxu0 0.0
    %569 = vmatpush1.msra.mxu0 0.0
    %570 = vmatprep.subr.mxu0 0.0
    %571 = vmatpush1.msra.mxu0 0.0
    %572 = vmatprep.subr.mxu0 0.0
    %573 = vmatpush1.msra.mxu0 0.0
    %574 = vmatprep.subr.mxu0 0.0
    %575 = vmatpush1.msra.mxu0 0.0
    %576 = vmatprep.subr.mxu0 0.0
    %577 = vmatpush1.msra.mxu0 0.0
    %578 = vmatprep.subr.mxu0 0.0
    %579 = vmatpush1.msra.mxu0 0.0
    %580 = vmatprep.subr.mxu0 0.0
    %581 = vmatpush1.msra.mxu0 0.0
    %582 = vmatprep.subr.mxu0 0.0
    %583 = vmatpush1.msra.mxu0 0.0
    %584 = vmatprep.subr.mxu0 0.0
    %585 = vmatpush1.msra.mxu0 0.0
    %586 = vmatprep.subr.mxu0 0.0
    %587 = vmatpush1.msra.mxu0 0.0
    %588 = vmatprep.subr.mxu0 0.0
    %589 = vmatpush1.msra.mxu0 0.0
    %590 = vmatprep.subr.mxu0 0.0
    %591 = vmatpush1.msra.mxu0 0.0
    %592 = vmatprep.mubr.f32.mxu0 0.0
    %593 = vmatmul.mubr.f32.gmra.mrb[0].mxu0 %v526
    %v594 = vpop.f32.mrb[0].mxu0
    %v595 = vadd.f32 0.0, %v594
    %v596 = vpop.f32.mrb[0].mxu0
    %597 = vdwg.mxu0
    %v598 = vmul.f32 %v595, %v113
    %v599 = vsel %vm199, %v598, 0.0
    %600 = vadd.xlane.f32.xlu0 %v599
    %v601 = vpop.xlane.xlu0 %600
    %v602 = vsub.f32 0.0, %v601
    %v603 = vmin.f32 %v602, 0.0
    %v604 = vand.u32 2147483647, %v602
    %v605 = vsub.f32 0.0, %v604
    %v606 = vmul.f32 %v605, 1.442695
    %v607 = vpow.pop %v606
    %v608 = vadd.f32 %v607, 1.0
    %v609 = vlog2.pop %v608
    %v610 = vmul.f32 %v609, 0.6931472
    %v611 = vmul.f32 -0.5, %v607
    %v612 = vadd.f32 %v611, 1.0
    %v613 = vmul.f32 %v612, %v607
    %v614 = vand.u32 2147483647, %v607
    %vm615 = vcmp.lt.f32.partialorder %v614, 0.0004427343
    %v616 = vsel %vm615, %v613, %v610
    %v617 = vsub.f32 %v603, %v616
    %v618 = vadd.f32 %v518, %v617
    %619 = vset.pattern.permute.xlu0 6
    %620 = vperm.xlu0 %619, %v29
    %v621 = vpop.permute.xlu0 %620
    %vm622 = vcmp.eq.s32.totalorder %v31, %v621
    %v623 = vsel %vm622, 1, 0
    %v624 = vcvt.s32.f32 %v623
    %v626 = vsel %vm38, %v624, 0
    %628 = vmatprep.subr.mxu0 0.0
    %629 = vmatpush1.msra.mxu0 %v22
    %630 = vmatprep.subr.mxu0 0.0
    %631 = vmatpush1.msra.mxu0 %v23
    %632 = vmatprep.subr.mxu0 0.0
    %633 = vmatpush1.msra.mxu0 %v24
    %634 = vmatprep.subr.mxu0 0.0
    %635 = vmatpush1.msra.mxu0 %v25
    %636 = vmatprep.subr.mxu0 0.0
    %637 = vmatpush1.msra.mxu0 %v26
    %638 = vmatprep.subr.mxu0 0.0
    %639 = vmatpush1.msra.mxu0 %v27
    %640 = vmatprep.subr.mxu0 0.0
    %641 = vmatpush1.msra.mxu0 %v126
    %642 = vmatprep.subr.mxu0 0.0
    %643 = vmatpush1.msra.mxu0 0.0
    %644 = vmatprep.subr.mxu0 0.0
    %645 = vmatpush1.msra.mxu0 0.0
    %646 = vmatprep.subr.mxu0 0.0
    %647 = vmatpush1.msra.mxu0 0.0
    %648 = vmatprep.subr.mxu0 0.0
    %649 = vmatpush1.msra.mxu0 0.0
    %650 = vmatprep.subr.mxu0 0.0
    %651 = vmatpush1.msra.mxu0 0.0
    %652 = vmatprep.subr.mxu0 0.0
    %653 = vmatpush1.msra.mxu0 0.0
    %654 = vmatprep.subr.mxu0 0.0
    %655 = vmatpush1.msra.mxu0 0.0
    %656 = vmatprep.subr.mxu0 0.0
    %657 = vmatpush1.msra.mxu0 0.0
    %658 = vmatprep.subr.mxu0 0.0
    %659 = vmatpush1.msra.mxu0 0.0
    %660 = vmatprep.subr.mxu0 0.0
    %661 = vmatpush1.msra.mxu0 0.0
    %662 = vmatprep.subr.mxu0 0.0
    %663 = vmatpush1.msra.mxu0 0.0
    %664 = vmatprep.subr.mxu0 0.0
    %665 = vmatpush1.msra.mxu0 0.0
    %666 = vmatprep.subr.mxu0 0.0
    %667 = vmatpush1.msra.mxu0 0.0
    %668 = vmatprep.subr.mxu0 0.0
    %669 = vmatpush1.msra.mxu0 0.0
    %670 = vmatprep.subr.mxu0 0.0
    %671 = vmatpush1.msra.mxu0 0.0
    %672 = vmatprep.subr.mxu0 0.0
    %673 = vmatpush1.msra.mxu0 0.0
    %674 = vmatprep.subr.mxu0 0.0
    %675 = vmatpush1.msra.mxu0 0.0
    %676 = vmatprep.subr.mxu0 0.0
    %677 = vmatpush1.msra.mxu0 0.0
    %678 = vmatprep.subr.mxu0 0.0
    %679 = vmatpush1.msra.mxu0 0.0
    %680 = vmatprep.subr.mxu0 0.0
    %681 = vmatpush1.msra.mxu0 0.0
    %682 = vmatprep.subr.mxu0 0.0
    %683 = vmatpush1.msra.mxu0 0.0
    %684 = vmatprep.subr.mxu0 0.0
    %685 = vmatpush1.msra.mxu0 0.0
    %686 = vmatprep.subr.mxu0 0.0
    %687 = vmatpush1.msra.mxu0 0.0
    %688 = vmatprep.subr.mxu0 0.0
    %689 = vmatpush1.msra.mxu0 0.0
    %690 = vmatprep.subr.mxu0 0.0
    %691 = vmatpush1.msra.mxu0 0.0
    %692 = vmatprep.mubr.f32.mxu0 0.0
    %693 = vmatmul.mubr.f32.gmra.mrb[0].mxu0 %v626
    %v694 = vpop.f32.mrb[0].mxu0
    %v695 = vadd.f32 0.0, %v694
    %v696 = vpop.f32.mrb[0].mxu0
    %697 = vdwg.mxu0
    %v698 = vmul.f32 %v695, %v113
    %v699 = vsel %vm199, %v698, 0.0
    %700 = vadd.xlane.f32.xlu0 %v699
    %v701 = vpop.xlane.xlu0 %700
    %v702 = vsub.f32 0.0, %v701
    %v703 = vmin.f32 %v702, 0.0
    %v704 = vand.u32 2147483647, %v702
    %v705 = vsub.f32 0.0, %v704
    %v706 = vmul.f32 %v705, 1.442695
    %v707 = vpow.pop %v706
    %v708 = vadd.f32 %v707, 1.0
    %v709 = vlog2.pop %v708
    %v710 = vmul.f32 %v709, 0.6931472
    %v711 = vmul.f32 -0.5, %v707
    %v712 = vadd.f32 %v711, 1.0
    %v713 = vmul.f32 %v712, %v707
    %v714 = vand.u32 2147483647, %v707
    %vm715 = vcmp.lt.f32.partialorder %v714, 0.0004427343
    %v716 = vsel %vm715, %v713, %v710
    %v717 = vsub.f32 %v703, %v716
    %v718 = vadd.f32 %v618, %v717
    %s719 = smul.u32 0, 8
    %v720 = vlaneseq
    %v721 = vshrl.u32 %v720, 7
    %v722 = vstv %s719
    %v723 = vadd.s32 %v722, %v721
    %vm724 = vcmp.lt.s32.totalorder %v723, 8
    %v725 = vsel %vm724, %v718, 0.0
    %vm726 = vcmask 7168
    %v727 = vsel %vm726, %v725, 0.0
    %728 = vadd.xlane.f32.xlu0 %v727
    %v729 = vpop.xlane.xlu0 %728
    %v730 = vrot.slane %v729, 4
    %v731 = vadd.f32 %v729, %v730
    %v732 = vrot.slane %v731, 2
    %v733 = vadd.f32 %v731, %v732
    %v734 = vrot.slane %v733, 1
    %v735 = vadd.f32 %v733, %v734
    %s736 = vtos %v735
    %v737 = vstv %s736
    %738 = vst [vmem:[#allocation2] sm:$0xff] %v737
    // Predicated region
    $region14: #{tpu_custom_call.1} parent=1 // pred_check
      _
    $region15: #{tpu_custom_call.1} parent=1 // pred_check_branch
      %740 = sbr.rel (0) target = $region17
    $region16: #{tpu_custom_call.1} parent=1 // pred_region
      %s742 = ssub.s32 128, 128
      %743 = vsyncadd [#allocation3], %s742
      %s745 = sshll.u32 [#allocation2], 4
      %s746 = int_to_ptr.vmem [resolvable:$true] %s745
      %748 = dma.vmem_to_hbm [thread:$0]  %s746, 128, %s3, [#allocation3]
    $region17: #{tpu_custom_call.1} parent=1 // pred_fallthru
      _
    // Predicated region
    $region18: #{tpu_custom_call.1} parent=1 // pred_check
      _
    $region19: #{tpu_custom_call.1} parent=1 // pred_check_branch
      %750 = sbr.rel (0) target = $region21
    $region20: #{tpu_custom_call.1} parent=1 // pred_region
      %751 = dma.done [#allocation3], 128
    $region21: #{tpu_custom_call.1} parent=1 // pred_fallthru
      _
    %752 = vsyncpa [#allocation3], 1

</llo_original>
